<compile_context>
chip_gen: v7x
topology: tpu7x:2x2x1
jax: 0.10.0
libtpu: 0.0.40
codegen_flags: <defaults>
</compile_context>

<pallas_src>
import jax
import jax.numpy as jnp
from jax.experimental import pallas as pl
from jax.experimental.pallas import tpu as pltpu
from functools import partial

LANE = 128      # lane-dense width: fused 4*H gate lanes == padded head lanes
SUBLANE = 8     # f32 sublane height; batch is padded to this


def _up8(x):
    return -(-x // 8) * 8


def make_offsets(vocab_size, num_pos, hidden_dim):
    """Row offsets of each block inside the single packed (rows, 128) buffer."""
    o_fw = 0                              # folded word_emb @ W_ih_word   (V, 4H)
    o_fp = o_fw + _up8(vocab_size)        # folded pos_emb  @ W_ih_pos    (P, 4H)
    o_b = o_fp + _up8(num_pos)            # fused LSTM bias               (1, 4H)
    o_whh = o_b + SUBLANE                 # fused recurrent weight        (H, 4H)
    o_h2o = o_whh + _up8(hidden_dim)      # hidden2out weight (lane-pad)  (H, 128)
    o_bh2o = o_h2o + _up8(hidden_dim)     # hidden2out bias               (1, 128)
    o_fc1 = o_bh2o + SUBLANE              # fc1 weight lifted             (128, 128)
    o_bfc1 = o_fc1 + LANE                 # fc1 bias                      (1, 128)
    total = o_bfc1 + SUBLANE
    return (o_fw, o_fp, o_b, o_whh, o_h2o, o_bh2o, o_fc1, o_bfc1), total


def lstm_head_kernel(idx_ref, params_ref, out_ref, *, S, BP, V, P, H, offs):
    """One invocation: embeddings -> S-step LSTM (fused gates) -> hidden2out -> fc1."""
    f32 = jnp.float32
    SB = S * BP
    o_fw, o_fp, o_b, o_whh, o_h2o, o_bh2o, o_fc1, o_bfc1 = offs

    # ---- packed parameter views (static offsets, loaded once, hoisted) ----
    folded_w = params_ref[pl.ds(o_fw, V), :]        # (V, 128)  word-emb folded into W_ih
    folded_p = params_ref[pl.ds(o_fp, P), :]        # (P, 128)  pos-emb folded into W_ih
    b_all = params_ref[pl.ds(o_b, 1), :]            # (1, 128)  fused gate bias
    whh = params_ref[pl.ds(o_whh, H), :]            # (H, 128)  fused recurrent weight
    w_h2o = params_ref[pl.ds(o_h2o, H), :]          # (H, 128)  lane-padded
    b_h2o = params_ref[pl.ds(o_bh2o, 1), :]         # (1, 128)
    w_fc1 = params_ref[pl.ds(o_fc1, LANE), :]       # (128, 128) lifted (zero-padded)
    b_fc1 = params_ref[pl.ds(o_bfc1, 1), :]         # (1, 128)

    # ---- fused embedding lookup + folded input projection (all timesteps) ----
    # one-hot @ folded-table on the MXU is an exact gather; gates stay fused (4H lanes).
    idx = idx_ref[...]                               # (S*BP, 2) int32
    sent_idx = idx[:, 0:1]
    pos_idx = idx[:, 1:2]
    oh_w = jnp.where(sent_idx == jax.lax.broadcasted_iota(jnp.int32, (SB, V), 1), 1.0, 0.0)
    oh_p = jnp.where(pos_idx == jax.lax.broadcasted_iota(jnp.int32, (SB, P), 1), 1.0, 0.0)
    xw_all = (jnp.dot(oh_w, folded_w, preferred_element_type=f32)
              + jnp.dot(oh_p, folded_p, preferred_element_type=f32)
              + b_all)                               # (S*BP, 128), gate order i,f,g,o

    # ---- serial recurrence: ONE fused (BP,H)@(H,4H) dot per timestep ----
    h = jnp.zeros((BP, H), f32)
    c = jnp.zeros((BP, H), f32)
    for t in range(S):                               # S small & static: unrolled
        lo = t * BP                                  # sublane-aligned row slice
        pre = xw_all[lo:lo + BP, :] + jnp.dot(h, whh, preferred_element_type=f32)
        i_g = jax.nn.sigmoid(pre[:, 0 * H:1 * H])
        f_g = jax.nn.sigmoid(pre[:, 1 * H:2 * H])
        g_g = jnp.tanh(pre[:, 2 * H:3 * H])
        o_g = jax.nn.sigmoid(pre[:, 3 * H:4 * H])
        c = f_g * c + i_g * g_g
        h = o_g * jnp.tanh(c)

    # ---- head: hidden2out then fc1; lane-dense (8, 128) unmasked store ----
    z = jnp.dot(h, w_h2o, preferred_element_type=f32) + b_h2o        # (BP, 128)
    out_ref[...] = (jnp.dot(z, w_fc1, preferred_element_type=f32)
                    + b_fc1).astype(out_ref.dtype)


@partial(jax.jit, static_argnames=("vocab_size", "num_pos", "hidden_dim", "output_dim"))
def lstm_2in_1out_forward(sent, pos, packed_params, *, vocab_size, num_pos,
                          hidden_dim, output_dim):
    """sent, pos: int (seq_len, batch). Returns (batch, output_dim) float32."""
    S, B = sent.shape
    BP = max(SUBLANE, _up8(B))                      # sublane-padded batch

    # Pack sent+pos into ONE (S*BP, 2) int32 buffer (pad rows use index 0 — valid).
    sent_p = jnp.zeros((S, BP), jnp.int32).at[:, :B].set(sent.astype(jnp.int32))
    pos_p = jnp.zeros((S, BP), jnp.int32).at[:, :B].set(pos.astype(jnp.int32))
    idx = jnp.stack([sent_p.reshape(S * BP), pos_p.reshape(S * BP)], axis=1)

    offs, _ = make_offsets(vocab_size, num_pos, hidden_dim)
    vmem = pl.BlockSpec(memory_space=pltpu.MemorySpace.VMEM)   # whole array in VMEM
    out_pad = pl.pallas_call(
        partial(lstm_head_kernel, S=S, BP=BP, V=vocab_size, P=num_pos,
                H=hidden_dim, offs=offs),
        out_shape=jax.ShapeDtypeStruct((BP, LANE), jnp.float32),
        in_specs=[vmem, vmem],
        out_specs=vmem,
    )(idx, packed_params)
    return out_pad[:B, :output_dim]


def init_params(key, vocab_size, num_pos, emb_dim, pos_dim, hidden_dim, ls_dim, output_dim):
    """PyTorch-equivalent parameterization (LSTM weights stored transposed, x@W form)."""
    ks = jax.random.split(key, 10)
    u = lambda k, shape, s: jax.random.uniform(k, shape, jnp.float32, -s, s)
    tot_dim = emb_dim + pos_dim
    sh = 1.0 / jnp.sqrt(hidden_dim)
    return {
        "word_emb": jax.random.normal(ks[0], (vocab_size, emb_dim), jnp.float32),
        "pos_emb": jax.random.normal(ks[1], (num_pos, pos_dim), jnp.float32),
        # gate order i, f, g, o in contiguous column blocks (fused layout).
        "w_ih": u(ks[2], (tot_dim, 4 * hidden_dim), sh),
        "w_hh": u(ks[3], (hidden_dim, 4 * hidden_dim), sh),
        "b": u(ks[4], (1, 4 * hidden_dim), sh) + u(ks[5], (1, 4 * hidden_dim), sh),
        "w_h2o": u(ks[6], (hidden_dim, ls_dim), 1.0 / jnp.sqrt(hidden_dim)),
        "b_h2o": u(ks[7], (1, ls_dim), 1.0 / jnp.sqrt(hidden_dim)),
        "w_fc1": u(ks[8], (ls_dim, output_dim), 1.0 / jnp.sqrt(ls_dim)),
        "b_fc1": u(ks[9], (1, output_dim), 1.0 / jnp.sqrt(ls_dim)),
    }


def prepare_kernel_params(params, emb_dim, hidden_dim):
    """One-time host re-layout: fold embedding tables into W_ih, pack everything
    into ONE contiguous lane-dense (rows, 128) f32 buffer."""
    E, H = emb_dim, hidden_dim
    V = params["word_emb"].shape[0]
    P = params["pos_emb"].shape[0]
    LS, OD = params["w_fc1"].shape
    assert 4 * H <= LANE and LS <= LANE and OD <= LANE, "demo config must fit 128 lanes"

    f32 = jnp.float32
    folded_w = params["word_emb"].astype(f32) @ params["w_ih"][:E].astype(f32)   # (V, 4H)
    folded_p = params["pos_emb"].astype(f32) @ params["w_ih"][E:].astype(f32)    # (P, 4H)

    offs, total = make_offsets(V, P, H)
    o_fw, o_fp, o_b, o_whh, o_h2o, o_bh2o, o_fc1, o_bfc1 = offs

    def put(buf, off, a):
        a = jnp.asarray(a, f32)
        return buf.at[off:off + a.shape[0], :a.shape[1]].set(a)

    buf = jnp.zeros((total, LANE), f32)
    buf = put(buf, o_fw, folded_w)
    buf = put(buf, o_fp, folded_p)
    buf = put(buf, o_b, params["b"])
    buf = put(buf, o_whh, params["w_hh"])
    buf = put(buf, o_h2o, params["w_h2o"])     # lane-padded to 128
    buf = put(buf, o_bh2o, params["b_h2o"])
    buf = put(buf, o_fc1, params["w_fc1"])     # lifted to (128,128) via zero padding
    buf = put(buf, o_bfc1, params["b_fc1"])
    return buf


def reference_forward(sent, pos, params):
    """Pure-JAX reference mirroring the PyTorch forward."""
    words = params["word_emb"][sent]
    tags = params["pos_emb"][pos]
    embeds = jnp.concatenate([words, tags], axis=2).astype(jnp.float32)  # (S, B, T)
    S, B, _ = embeds.shape
    Hd = params["w_hh"].shape[0]

    def step(carry, x_t):
        h, c = carry
        gates = x_t @ params["w_ih"] + h @ params["w_hh"] + params["b"]
        i_g = jax.nn.sigmoid(gates[:, 0 * Hd:1 * Hd])
        f_g = jax.nn.sigmoid(gates[:, 1 * Hd:2 * Hd])
        g_g = jnp.tanh(gates[:, 2 * Hd:3 * Hd])
        o_g = jax.nn.sigmoid(gates[:, 3 * Hd:4 * Hd])
        c_new = f_g * c + i_g * g_g
        h_new = o_g * jnp.tanh(c_new)
        return (h_new, c_new), None

    h0 = jnp.zeros((B, Hd), jnp.float32)
    (h_fin, _), _ = jax.lax.scan(step, (h0, h0), embeds)
    z = h_fin @ params["w_h2o"] + params["b_h2o"]
    return z @ params["w_fc1"] + params["b_fc1"]


if __name__ == "__main__":
    vocab_size, num_pos = 50, 12
    emb_dim, pos_dim = 16, 8
    hidden_dim, ls_dim, output_dim = 32, 16, 8
    seq_len, batch = 8, 2

    key = jax.random.PRNGKey(0)
    k_p, k_s, k_t = jax.random.split(key, 3)
    params = init_params(k_p, vocab_size, num_pos, emb_dim, pos_dim,
                         hidden_dim, ls_dim, output_dim)
    packed = prepare_kernel_params(params, emb_dim, hidden_dim)

    sent = jax.random.randint(k_s, (seq_len, batch), 0, vocab_size, jnp.int32)
    pos = jax.random.randint(k_t, (seq_len, batch), 0, num_pos, jnp.int32)

    out = lstm_2in_1out_forward(sent, pos, packed,
                                vocab_size=vocab_size, num_pos=num_pos,
                                hidden_dim=hidden_dim, output_dim=output_dim)
    out = jax.block_until_ready(out)
    assert out.shape == (batch, output_dim)

    ref = reference_forward(sent, pos, params)
    assert jnp.allclose(out, ref, rtol=1e-4, atol=1e-4), "mismatch vs reference"

    print("KERNEL_OK")
</pallas_src>

<mosaic_0001>
module attributes {stable_mosaic.version = 11 : i64} {
  func.func @lstm_head_kernel(%arg0: memref<64x2xi32, #tpu.memory_space<vmem>>, %arg1: memref<288x128xf32, #tpu.memory_space<vmem>>, %arg2: memref<8x128xf32, #tpu.memory_space<vmem>>) attributes {dimension_semantics = [], scalar_prefetch = 0 : i64, scratch_operands = 0 : i64, tpu.core_type = #tpu.core_type<tc>} {
    %c0 = arith.constant 0 : index
    %c0_0 = arith.constant 0 : index
    %0 = vector.load %arg1[%c0, %c0_0] : memref<288x128xf32, #tpu.memory_space<vmem>>, vector<50x128xf32>
    %c56 = arith.constant 56 : index
    %c0_1 = arith.constant 0 : index
    %1 = vector.load %arg1[%c56, %c0_1] : memref<288x128xf32, #tpu.memory_space<vmem>>, vector<12x128xf32>
    %c72 = arith.constant 72 : index
    %c0_2 = arith.constant 0 : index
    %2 = vector.load %arg1[%c72, %c0_2] : memref<288x128xf32, #tpu.memory_space<vmem>>, vector<1x128xf32>
    %c80 = arith.constant 80 : index
    %c0_3 = arith.constant 0 : index
    %3 = vector.load %arg1[%c80, %c0_3] : memref<288x128xf32, #tpu.memory_space<vmem>>, vector<32x128xf32>
    %c112 = arith.constant 112 : index
    %c0_4 = arith.constant 0 : index
    %4 = vector.load %arg1[%c112, %c0_4] : memref<288x128xf32, #tpu.memory_space<vmem>>, vector<32x128xf32>
    %c144 = arith.constant 144 : index
    %c0_5 = arith.constant 0 : index
    %5 = vector.load %arg1[%c144, %c0_5] : memref<288x128xf32, #tpu.memory_space<vmem>>, vector<1x128xf32>
    %c152 = arith.constant 152 : index
    %c0_6 = arith.constant 0 : index
    %6 = vector.load %arg1[%c152, %c0_6] : memref<288x128xf32, #tpu.memory_space<vmem>>, vector<128x128xf32>
    %c280 = arith.constant 280 : index
    %c0_7 = arith.constant 0 : index
    %7 = vector.load %arg1[%c280, %c0_7] : memref<288x128xf32, #tpu.memory_space<vmem>>, vector<1x128xf32>
    %c0_8 = arith.constant 0 : index
    %c0_9 = arith.constant 0 : index
    %8 = vector.load %arg0[%c0_8, %c0_9] : memref<64x2xi32, #tpu.memory_space<vmem>>, vector<64x2xi32>
    %9 = vector.extract_strided_slice %8 {offsets = [0, 0], sizes = [64, 1], strides = [1, 1]} : vector<64x2xi32> to vector<64x1xi32>
    %10 = vector.extract_strided_slice %8 {offsets = [0, 1], sizes = [64, 1], strides = [1, 1]} : vector<64x2xi32> to vector<64x1xi32>
    %11 = tpu.iota {dimensions = array<i32: 1>} : vector<64x50xi32>
    %12 = vector.broadcast %9 : vector<64x1xi32> to vector<64x50xi32>
    %13 = arith.cmpi eq, %12, %11 : vector<64x50xi32>
    %cst = arith.constant 1.000000e+00 : f32
    %cst_10 = arith.constant 0.000000e+00 : f32
    %14 = vector.broadcast %cst : f32 to vector<64x50xf32>
    %15 = vector.broadcast %cst_10 : f32 to vector<64x50xf32>
    %16 = arith.select %13, %14, %15 : vector<64x50xi1>, vector<64x50xf32>
    %17 = tpu.iota {dimensions = array<i32: 1>} : vector<64x12xi32>
    %18 = vector.broadcast %10 : vector<64x1xi32> to vector<64x12xi32>
    %19 = arith.cmpi eq, %18, %17 : vector<64x12xi32>
    %cst_11 = arith.constant 1.000000e+00 : f32
    %cst_12 = arith.constant 0.000000e+00 : f32
    %20 = vector.broadcast %cst_11 : f32 to vector<64x12xf32>
    %21 = vector.broadcast %cst_12 : f32 to vector<64x12xf32>
    %22 = arith.select %19, %20, %21 : vector<64x12xi1>, vector<64x12xf32>
    %cst_13 = arith.constant dense<0.000000e+00> : vector<64x128xf32>
    %23 = tpu.matmul %16, %0, %cst_13 {dimension_numbers = #tpu.dot_dimension_numbers<[1], [0], [0], [1], [0, 0, 1, 1], [], []>} : vector<64x50xf32>, vector<50x128xf32>, vector<64x128xf32> -> vector<64x128xf32>
    %cst_14 = arith.constant dense<0.000000e+00> : vector<64x128xf32>
    %24 = tpu.matmul %22, %1, %cst_14 {dimension_numbers = #tpu.dot_dimension_numbers<[1], [0], [0], [1], [0, 0, 1, 1], [], []>} : vector<64x12xf32>, vector<12x128xf32>, vector<64x128xf32> -> vector<64x128xf32>
    %25 = arith.addf %23, %24 : vector<64x128xf32>
    %26 = vector.broadcast %2 : vector<1x128xf32> to vector<64x128xf32>
    %27 = arith.addf %25, %26 : vector<64x128xf32>
    %cst_15 = arith.constant 0.000000e+00 : f32
    %28 = vector.broadcast %cst_15 : f32 to vector<8x32xf32>
    %cst_16 = arith.constant 0.000000e+00 : f32
    %29 = vector.broadcast %cst_16 : f32 to vector<8x32xf32>
    %30 = vector.extract_strided_slice %27 {offsets = [0, 0], sizes = [8, 128], strides = [1, 1]} : vector<64x128xf32> to vector<8x128xf32>
    %cst_17 = arith.constant dense<0.000000e+00> : vector<8x128xf32>
    %31 = tpu.matmul %28, %3, %cst_17 {dimension_numbers = #tpu.dot_dimension_numbers<[1], [0], [0], [1], [0, 0, 1, 1], [], []>} : vector<8x32xf32>, vector<32x128xf32>, vector<8x128xf32> -> vector<8x128xf32>
    %32 = arith.addf %30, %31 : vector<8x128xf32>
    %33 = vector.extract_strided_slice %32 {offsets = [0, 0], sizes = [8, 32], strides = [1, 1]} : vector<8x128xf32> to vector<8x32xf32>
    %34 = arith.negf %33 : vector<8x32xf32>
    %35 = math.exp %34 : vector<8x32xf32>
    %cst_18 = arith.constant 1.000000e+00 : f32
    %36 = vector.broadcast %cst_18 : f32 to vector<8x32xf32>
    %37 = arith.addf %36, %35 : vector<8x32xf32>
    %38 = arith.divf %36, %37 : vector<8x32xf32>
    %39 = vector.extract_strided_slice %32 {offsets = [0, 32], sizes = [8, 32], strides = [1, 1]} : vector<8x128xf32> to vector<8x32xf32>
    %40 = arith.negf %39 : vector<8x32xf32>
    %41 = math.exp %40 : vector<8x32xf32>
    %cst_19 = arith.constant 1.000000e+00 : f32
    %42 = vector.broadcast %cst_19 : f32 to vector<8x32xf32>
    %43 = arith.addf %42, %41 : vector<8x32xf32>
    %44 = arith.divf %42, %43 : vector<8x32xf32>
    %45 = vector.extract_strided_slice %32 {offsets = [0, 64], sizes = [8, 32], strides = [1, 1]} : vector<8x128xf32> to vector<8x32xf32>
    %46 = math.tanh %45 : vector<8x32xf32>
    %47 = vector.extract_strided_slice %32 {offsets = [0, 96], sizes = [8, 32], strides = [1, 1]} : vector<8x128xf32> to vector<8x32xf32>
    %48 = arith.negf %47 : vector<8x32xf32>
    %49 = math.exp %48 : vector<8x32xf32>
    %cst_20 = arith.constant 1.000000e+00 : f32
    %50 = vector.broadcast %cst_20 : f32 to vector<8x32xf32>
    %51 = arith.addf %50, %49 : vector<8x32xf32>
    %52 = arith.divf %50, %51 : vector<8x32xf32>
    %53 = arith.mulf %44, %29 : vector<8x32xf32>
    %54 = arith.mulf %38, %46 : vector<8x32xf32>
    %55 = arith.addf %53, %54 : vector<8x32xf32>
    %56 = math.tanh %55 : vector<8x32xf32>
    %57 = arith.mulf %52, %56 : vector<8x32xf32>
    %58 = vector.extract_strided_slice %27 {offsets = [8, 0], sizes = [8, 128], strides = [1, 1]} : vector<64x128xf32> to vector<8x128xf32>
    %cst_21 = arith.constant dense<0.000000e+00> : vector<8x128xf32>
    %59 = tpu.matmul %57, %3, %cst_21 {dimension_numbers = #tpu.dot_dimension_numbers<[1], [0], [0], [1], [0, 0, 1, 1], [], []>} : vector<8x32xf32>, vector<32x128xf32>, vector<8x128xf32> -> vector<8x128xf32>
    %60 = arith.addf %58, %59 : vector<8x128xf32>
    %61 = vector.extract_strided_slice %60 {offsets = [0, 0], sizes = [8, 32], strides = [1, 1]} : vector<8x128xf32> to vector<8x32xf32>
    %62 = arith.negf %61 : vector<8x32xf32>
    %63 = math.exp %62 : vector<8x32xf32>
    %cst_22 = arith.constant 1.000000e+00 : f32
    %64 = vector.broadcast %cst_22 : f32 to vector<8x32xf32>
    %65 = arith.addf %64, %63 : vector<8x32xf32>
    %66 = arith.divf %64, %65 : vector<8x32xf32>
    %67 = vector.extract_strided_slice %60 {offsets = [0, 32], sizes = [8, 32], strides = [1, 1]} : vector<8x128xf32> to vector<8x32xf32>
    %68 = arith.negf %67 : vector<8x32xf32>
    %69 = math.exp %68 : vector<8x32xf32>
    %cst_23 = arith.constant 1.000000e+00 : f32
    %70 = vector.broadcast %cst_23 : f32 to vector<8x32xf32>
    %71 = arith.addf %70, %69 : vector<8x32xf32>
    %72 = arith.divf %70, %71 : vector<8x32xf32>
    %73 = vector.extract_strided_slice %60 {offsets = [0, 64], sizes = [8, 32], strides = [1, 1]} : vector<8x128xf32> to vector<8x32xf32>
    %74 = math.tanh %73 : vector<8x32xf32>
    %75 = vector.extract_strided_slice %60 {offsets = [0, 96], sizes = [8, 32], strides = [1, 1]} : vector<8x128xf32> to vector<8x32xf32>
    %76 = arith.negf %75 : vector<8x32xf32>
    %77 = math.exp %76 : vector<8x32xf32>
    %cst_24 = arith.constant 1.000000e+00 : f32
    %78 = vector.broadcast %cst_24 : f32 to vector<8x32xf32>
    %79 = arith.addf %78, %77 : vector<8x32xf32>
    %80 = arith.divf %78, %79 : vector<8x32xf32>
    %81 = arith.mulf %72, %55 : vector<8x32xf32>
    %82 = arith.mulf %66, %74 : vector<8x32xf32>
    %83 = arith.addf %81, %82 : vector<8x32xf32>
    %84 = math.tanh %83 : vector<8x32xf32>
    %85 = arith.mulf %80, %84 : vector<8x32xf32>
    %86 = vector.extract_strided_slice %27 {offsets = [16, 0], sizes = [8, 128], strides = [1, 1]} : vector<64x128xf32> to vector<8x128xf32>
    %cst_25 = arith.constant dense<0.000000e+00> : vector<8x128xf32>
    %87 = tpu.matmul %85, %3, %cst_25 {dimension_numbers = #tpu.dot_dimension_numbers<[1], [0], [0], [1], [0, 0, 1, 1], [], []>} : vector<8x32xf32>, vector<32x128xf32>, vector<8x128xf32> -> vector<8x128xf32>
    %88 = arith.addf %86, %87 : vector<8x128xf32>
    %89 = vector.extract_strided_slice %88 {offsets = [0, 0], sizes = [8, 32], strides = [1, 1]} : vector<8x128xf32> to vector<8x32xf32>
    %90 = arith.negf %89 : vector<8x32xf32>
    %91 = math.exp %90 : vector<8x32xf32>
    %cst_26 = arith.constant 1.000000e+00 : f32
    %92 = vector.broadcast %cst_26 : f32 to vector<8x32xf32>
    %93 = arith.addf %92, %91 : vector<8x32xf32>
    %94 = arith.divf %92, %93 : vector<8x32xf32>
    %95 = vector.extract_strided_slice %88 {offsets = [0, 32], sizes = [8, 32], strides = [1, 1]} : vector<8x128xf32> to vector<8x32xf32>
    %96 = arith.negf %95 : vector<8x32xf32>
    %97 = math.exp %96 : vector<8x32xf32>
    %cst_27 = arith.constant 1.000000e+00 : f32
    %98 = vector.broadcast %cst_27 : f32 to vector<8x32xf32>
    %99 = arith.addf %98, %97 : vector<8x32xf32>
    %100 = arith.divf %98, %99 : vector<8x32xf32>
    %101 = vector.extract_strided_slice %88 {offsets = [0, 64], sizes = [8, 32], strides = [1, 1]} : vector<8x128xf32> to vector<8x32xf32>
    %102 = math.tanh %101 : vector<8x32xf32>
    %103 = vector.extract_strided_slice %88 {offsets = [0, 96], sizes = [8, 32], strides = [1, 1]} : vector<8x128xf32> to vector<8x32xf32>
    %104 = arith.negf %103 : vector<8x32xf32>
    %105 = math.exp %104 : vector<8x32xf32>
    %cst_28 = arith.constant 1.000000e+00 : f32
    %106 = vector.broadcast %cst_28 : f32 to vector<8x32xf32>
    %107 = arith.addf %106, %105 : vector<8x32xf32>
    %108 = arith.divf %106, %107 : vector<8x32xf32>
    %109 = arith.mulf %100, %83 : vector<8x32xf32>
    %110 = arith.mulf %94, %102 : vector<8x32xf32>
    %111 = arith.addf %109, %110 : vector<8x32xf32>
    %112 = math.tanh %111 : vector<8x32xf32>
    %113 = arith.mulf %108, %112 : vector<8x32xf32>
    %114 = vector.extract_strided_slice %27 {offsets = [24, 0], sizes = [8, 128], strides = [1, 1]} : vector<64x128xf32> to vector<8x128xf32>
    %cst_29 = arith.constant dense<0.000000e+00> : vector<8x128xf32>
    %115 = tpu.matmul %113, %3, %cst_29 {dimension_numbers = #tpu.dot_dimension_numbers<[1], [0], [0], [1], [0, 0, 1, 1], [], []>} : vector<8x32xf32>, vector<32x128xf32>, vector<8x128xf32> -> vector<8x128xf32>
    %116 = arith.addf %114, %115 : vector<8x128xf32>
    %117 = vector.extract_strided_slice %116 {offsets = [0, 0], sizes = [8, 32], strides = [1, 1]} : vector<8x128xf32> to vector<8x32xf32>
    %118 = arith.negf %117 : vector<8x32xf32>
    %119 = math.exp %118 : vector<8x32xf32>
    %cst_30 = arith.constant 1.000000e+00 : f32
    %120 = vector.broadcast %cst_30 : f32 to vector<8x32xf32>
    %121 = arith.addf %120, %119 : vector<8x32xf32>
    %122 = arith.divf %120, %121 : vector<8x32xf32>
    %123 = vector.extract_strided_slice %116 {offsets = [0, 32], sizes = [8, 32], strides = [1, 1]} : vector<8x128xf32> to vector<8x32xf32>
    %124 = arith.negf %123 : vector<8x32xf32>
    %125 = math.exp %124 : vector<8x32xf32>
    %cst_31 = arith.constant 1.000000e+00 : f32
    %126 = vector.broadcast %cst_31 : f32 to vector<8x32xf32>
    %127 = arith.addf %126, %125 : vector<8x32xf32>
    %128 = arith.divf %126, %127 : vector<8x32xf32>
    %129 = vector.extract_strided_slice %116 {offsets = [0, 64], sizes = [8, 32], strides = [1, 1]} : vector<8x128xf32> to vector<8x32xf32>
    %130 = math.tanh %129 : vector<8x32xf32>
    %131 = vector.extract_strided_slice %116 {offsets = [0, 96], sizes = [8, 32], strides = [1, 1]} : vector<8x128xf32> to vector<8x32xf32>
    %132 = arith.negf %131 : vector<8x32xf32>
    %133 = math.exp %132 : vector<8x32xf32>
    %cst_32 = arith.constant 1.000000e+00 : f32
    %134 = vector.broadcast %cst_32 : f32 to vector<8x32xf32>
    %135 = arith.addf %134, %133 : vector<8x32xf32>
    %136 = arith.divf %134, %135 : vector<8x32xf32>
    %137 = arith.mulf %128, %111 : vector<8x32xf32>
    %138 = arith.mulf %122, %130 : vector<8x32xf32>
    %139 = arith.addf %137, %138 : vector<8x32xf32>
    %140 = math.tanh %139 : vector<8x32xf32>
    %141 = arith.mulf %136, %140 : vector<8x32xf32>
    %142 = vector.extract_strided_slice %27 {offsets = [32, 0], sizes = [8, 128], strides = [1, 1]} : vector<64x128xf32> to vector<8x128xf32>
    %cst_33 = arith.constant dense<0.000000e+00> : vector<8x128xf32>
    %143 = tpu.matmul %141, %3, %cst_33 {dimension_numbers = #tpu.dot_dimension_numbers<[1], [0], [0], [1], [0, 0, 1, 1], [], []>} : vector<8x32xf32>, vector<32x128xf32>, vector<8x128xf32> -> vector<8x128xf32>
    %144 = arith.addf %142, %143 : vector<8x128xf32>
    %145 = vector.extract_strided_slice %144 {offsets = [0, 0], sizes = [8, 32], strides = [1, 1]} : vector<8x128xf32> to vector<8x32xf32>
    %146 = arith.negf %145 : vector<8x32xf32>
    %147 = math.exp %146 : vector<8x32xf32>
    %cst_34 = arith.constant 1.000000e+00 : f32
    %148 = vector.broadcast %cst_34 : f32 to vector<8x32xf32>
    %149 = arith.addf %148, %147 : vector<8x32xf32>
    %150 = arith.divf %148, %149 : vector<8x32xf32>
    %151 = vector.extract_strided_slice %144 {offsets = [0, 32], sizes = [8, 32], strides = [1, 1]} : vector<8x128xf32> to vector<8x32xf32>
    %152 = arith.negf %151 : vector<8x32xf32>
    %153 = math.exp %152 : vector<8x32xf32>
    %cst_35 = arith.constant 1.000000e+00 : f32
    %154 = vector.broadcast %cst_35 : f32 to vector<8x32xf32>
    %155 = arith.addf %154, %153 : vector<8x32xf32>
    %156 = arith.divf %154, %155 : vector<8x32xf32>
    %157 = vector.extract_strided_slice %144 {offsets = [0, 64], sizes = [8, 32], strides = [1, 1]} : vector<8x128xf32> to vector<8x32xf32>
    %158 = math.tanh %157 : vector<8x32xf32>
    %159 = vector.extract_strided_slice %144 {offsets = [0, 96], sizes = [8, 32], strides = [1, 1]} : vector<8x128xf32> to vector<8x32xf32>
    %160 = arith.negf %159 : vector<8x32xf32>
    %161 = math.exp %160 : vector<8x32xf32>
    %cst_36 = arith.constant 1.000000e+00 : f32
    %162 = vector.broadcast %cst_36 : f32 to vector<8x32xf32>
    %163 = arith.addf %162, %161 : vector<8x32xf32>
    %164 = arith.divf %162, %163 : vector<8x32xf32>
    %165 = arith.mulf %156, %139 : vector<8x32xf32>
    %166 = arith.mulf %150, %158 : vector<8x32xf32>
    %167 = arith.addf %165, %166 : vector<8x32xf32>
    %168 = math.tanh %167 : vector<8x32xf32>
    %169 = arith.mulf %164, %168 : vector<8x32xf32>
    %170 = vector.extract_strided_slice %27 {offsets = [40, 0], sizes = [8, 128], strides = [1, 1]} : vector<64x128xf32> to vector<8x128xf32>
    %cst_37 = arith.constant dense<0.000000e+00> : vector<8x128xf32>
    %171 = tpu.matmul %169, %3, %cst_37 {dimension_numbers = #tpu.dot_dimension_numbers<[1], [0], [0], [1], [0, 0, 1, 1], [], []>} : vector<8x32xf32>, vector<32x128xf32>, vector<8x128xf32> -> vector<8x128xf32>
    %172 = arith.addf %170, %171 : vector<8x128xf32>
    %173 = vector.extract_strided_slice %172 {offsets = [0, 0], sizes = [8, 32], strides = [1, 1]} : vector<8x128xf32> to vector<8x32xf32>
    %174 = arith.negf %173 : vector<8x32xf32>
    %175 = math.exp %174 : vector<8x32xf32>
    %cst_38 = arith.constant 1.000000e+00 : f32
    %176 = vector.broadcast %cst_38 : f32 to vector<8x32xf32>
    %177 = arith.addf %176, %175 : vector<8x32xf32>
    %178 = arith.divf %176, %177 : vector<8x32xf32>
    %179 = vector.extract_strided_slice %172 {offsets = [0, 32], sizes = [8, 32], strides = [1, 1]} : vector<8x128xf32> to vector<8x32xf32>
    %180 = arith.negf %179 : vector<8x32xf32>
    %181 = math.exp %180 : vector<8x32xf32>
    %cst_39 = arith.constant 1.000000e+00 : f32
    %182 = vector.broadcast %cst_39 : f32 to vector<8x32xf32>
    %183 = arith.addf %182, %181 : vector<8x32xf32>
    %184 = arith.divf %182, %183 : vector<8x32xf32>
    %185 = vector.extract_strided_slice %172 {offsets = [0, 64], sizes = [8, 32], strides = [1, 1]} : vector<8x128xf32> to vector<8x32xf32>
    %186 = math.tanh %185 : vector<8x32xf32>
    %187 = vector.extract_strided_slice %172 {offsets = [0, 96], sizes = [8, 32], strides = [1, 1]} : vector<8x128xf32> to vector<8x32xf32>
    %188 = arith.negf %187 : vector<8x32xf32>
    %189 = math.exp %188 : vector<8x32xf32>
    %cst_40 = arith.constant 1.000000e+00 : f32
    %190 = vector.broadcast %cst_40 : f32 to vector<8x32xf32>
    %191 = arith.addf %190, %189 : vector<8x32xf32>
    %192 = arith.divf %190, %191 : vector<8x32xf32>
    %193 = arith.mulf %184, %167 : vector<8x32xf32>
    %194 = arith.mulf %178, %186 : vector<8x32xf32>
    %195 = arith.addf %193, %194 : vector<8x32xf32>
    %196 = math.tanh %195 : vector<8x32xf32>
    %197 = arith.mulf %192, %196 : vector<8x32xf32>
    %198 = vector.extract_strided_slice %27 {offsets = [48, 0], sizes = [8, 128], strides = [1, 1]} : vector<64x128xf32> to vector<8x128xf32>
    %cst_41 = arith.constant dense<0.000000e+00> : vector<8x128xf32>
    %199 = tpu.matmul %197, %3, %cst_41 {dimension_numbers = #tpu.dot_dimension_numbers<[1], [0], [0], [1], [0, 0, 1, 1], [], []>} : vector<8x32xf32>, vector<32x128xf32>, vector<8x128xf32> -> vector<8x128xf32>
    %200 = arith.addf %198, %199 : vector<8x128xf32>
    %201 = vector.extract_strided_slice %200 {offsets = [0, 0], sizes = [8, 32], strides = [1, 1]} : vector<8x128xf32> to vector<8x32xf32>
    %202 = arith.negf %201 : vector<8x32xf32>
    %203 = math.exp %202 : vector<8x32xf32>
    %cst_42 = arith.constant 1.000000e+00 : f32
    %204 = vector.broadcast %cst_42 : f32 to vector<8x32xf32>
    %205 = arith.addf %204, %203 : vector<8x32xf32>
    %206 = arith.divf %204, %205 : vector<8x32xf32>
    %207 = vector.extract_strided_slice %200 {offsets = [0, 32], sizes = [8, 32], strides = [1, 1]} : vector<8x128xf32> to vector<8x32xf32>
    %208 = arith.negf %207 : vector<8x32xf32>
    %209 = math.exp %208 : vector<8x32xf32>
    %cst_43 = arith.constant 1.000000e+00 : f32
    %210 = vector.broadcast %cst_43 : f32 to vector<8x32xf32>
    %211 = arith.addf %210, %209 : vector<8x32xf32>
    %212 = arith.divf %210, %211 : vector<8x32xf32>
    %213 = vector.extract_strided_slice %200 {offsets = [0, 64], sizes = [8, 32], strides = [1, 1]} : vector<8x128xf32> to vector<8x32xf32>
    %214 = math.tanh %213 : vector<8x32xf32>
    %215 = vector.extract_strided_slice %200 {offsets = [0, 96], sizes = [8, 32], strides = [1, 1]} : vector<8x128xf32> to vector<8x32xf32>
    %216 = arith.negf %215 : vector<8x32xf32>
    %217 = math.exp %216 : vector<8x32xf32>
    %cst_44 = arith.constant 1.000000e+00 : f32
    %218 = vector.broadcast %cst_44 : f32 to vector<8x32xf32>
    %219 = arith.addf %218, %217 : vector<8x32xf32>
    %220 = arith.divf %218, %219 : vector<8x32xf32>
    %221 = arith.mulf %212, %195 : vector<8x32xf32>
    %222 = arith.mulf %206, %214 : vector<8x32xf32>
    %223 = arith.addf %221, %222 : vector<8x32xf32>
    %224 = math.tanh %223 : vector<8x32xf32>
    %225 = arith.mulf %220, %224 : vector<8x32xf32>
    %226 = vector.extract_strided_slice %27 {offsets = [56, 0], sizes = [8, 128], strides = [1, 1]} : vector<64x128xf32> to vector<8x128xf32>
    %cst_45 = arith.constant dense<0.000000e+00> : vector<8x128xf32>
    %227 = tpu.matmul %225, %3, %cst_45 {dimension_numbers = #tpu.dot_dimension_numbers<[1], [0], [0], [1], [0, 0, 1, 1], [], []>} : vector<8x32xf32>, vector<32x128xf32>, vector<8x128xf32> -> vector<8x128xf32>
    %228 = arith.addf %226, %227 : vector<8x128xf32>
    %229 = vector.extract_strided_slice %228 {offsets = [0, 0], sizes = [8, 32], strides = [1, 1]} : vector<8x128xf32> to vector<8x32xf32>
    %230 = arith.negf %229 : vector<8x32xf32>
    %231 = math.exp %230 : vector<8x32xf32>
    %cst_46 = arith.constant 1.000000e+00 : f32
    %232 = vector.broadcast %cst_46 : f32 to vector<8x32xf32>
    %233 = arith.addf %232, %231 : vector<8x32xf32>
    %234 = arith.divf %232, %233 : vector<8x32xf32>
    %235 = vector.extract_strided_slice %228 {offsets = [0, 32], sizes = [8, 32], strides = [1, 1]} : vector<8x128xf32> to vector<8x32xf32>
    %236 = arith.negf %235 : vector<8x32xf32>
    %237 = math.exp %236 : vector<8x32xf32>
    %cst_47 = arith.constant 1.000000e+00 : f32
    %238 = vector.broadcast %cst_47 : f32 to vector<8x32xf32>
    %239 = arith.addf %238, %237 : vector<8x32xf32>
    %240 = arith.divf %238, %239 : vector<8x32xf32>
    %241 = vector.extract_strided_slice %228 {offsets = [0, 64], sizes = [8, 32], strides = [1, 1]} : vector<8x128xf32> to vector<8x32xf32>
    %242 = math.tanh %241 : vector<8x32xf32>
    %243 = vector.extract_strided_slice %228 {offsets = [0, 96], sizes = [8, 32], strides = [1, 1]} : vector<8x128xf32> to vector<8x32xf32>
    %244 = arith.negf %243 : vector<8x32xf32>
    %245 = math.exp %244 : vector<8x32xf32>
    %cst_48 = arith.constant 1.000000e+00 : f32
    %246 = vector.broadcast %cst_48 : f32 to vector<8x32xf32>
    %247 = arith.addf %246, %245 : vector<8x32xf32>
    %248 = arith.divf %246, %247 : vector<8x32xf32>
    %249 = arith.mulf %240, %223 : vector<8x32xf32>
    %250 = arith.mulf %234, %242 : vector<8x32xf32>
    %251 = arith.addf %249, %250 : vector<8x32xf32>
    %252 = math.tanh %251 : vector<8x32xf32>
    %253 = arith.mulf %248, %252 : vector<8x32xf32>
    %cst_49 = arith.constant dense<0.000000e+00> : vector<8x128xf32>
    %254 = tpu.matmul %253, %4, %cst_49 {dimension_numbers = #tpu.dot_dimension_numbers<[1], [0], [0], [1], [0, 0, 1, 1], [], []>} : vector<8x32xf32>, vector<32x128xf32>, vector<8x128xf32> -> vector<8x128xf32>
    %255 = vector.broadcast %5 : vector<1x128xf32> to vector<8x128xf32>
    %256 = arith.addf %254, %255 : vector<8x128xf32>
    %cst_50 = arith.constant dense<0.000000e+00> : vector<8x128xf32>
    %257 = tpu.matmul %256, %6, %cst_50 {dimension_numbers = #tpu.dot_dimension_numbers<[1], [0], [0], [1], [0, 0, 1, 1], [], []>} : vector<8x128xf32>, vector<128x128xf32>, vector<8x128xf32> -> vector<8x128xf32>
    %258 = vector.broadcast %7 : vector<1x128xf32> to vector<8x128xf32>
    %259 = arith.addf %257, %258 : vector<8x128xf32>
    %c0_51 = arith.constant 0 : index
    %c0_52 = arith.constant 0 : index
    %260 = vector.load %arg2[%c0_51, %c0_52] : memref<8x128xf32, #tpu.memory_space<vmem>>, vector<8x128xf32>
    tpu.vector_store %arg2[%c0_51, %c0_52], %259 {strides = array<i32>} : memref<8x128xf32, #tpu.memory_space<vmem>>, vector<8x128xf32>,
    return
  }
}

</mosaic_0001>

<llo_original>
// kernel: lstm_2in_1out_forward.1
$region0: #{lstm_2in_1out_forward.1}
  #allocation0 [shape = 'u32[]', space=smem, size = 0x4, offset = 0x4, fixed_abs, tag = 'smem constant byte address 0x4 - core index']
  #allocation1 [shape = 'u32[144,128]{1,0:T(1,128)}', space=vmem, size = 0x12000, scoped, tag = 'internal scratch']
  %s0 = inlined_call_operand.vmem [shape: s32[64,2], index: 0, kind: input, shape index: {}]
  %s1 = inlined_call_operand.hbm [shape: f32[288,128], index: 1, kind: input, shape index: {}]
  %s2 = inlined_call_operand.vmem [shape: f32[8,128], index: 2, kind: output, shape index: {}]
  %s3 = sld [smem:[#allocation0]]
  $region22: #{lstm_2in_1out_forward.1} parent=0
    _
  %s5 = ssub.s32 1, %s3
  %s6 = scalar_select 0, %s5, %s3
  $region1: #{lstm_2in_1out_forward.1} parent=0
    #allocation2 [shape = 'u8[147456]{0}', space=vmem, size = 0x24000, scoped, tag = 'input window, operand 1, single buffered']
    #allocation3 [shape = 's32[1]{0}', space=sflag, size = 0x4, scoped, tag = 'scoped memory for lstm_2in_1out_forward.1']
    %7 = vsyncpa [#allocation3], 0
    // Predicated region
    $region2: #{lstm_2in_1out_forward.1} parent=1 // pred_check
      _
    $region3: #{lstm_2in_1out_forward.1} parent=1 // pred_check_branch
      %9 = sbr.rel (0) target = $region5
    $region4: #{lstm_2in_1out_forward.1} parent=1 // pred_region
      _
    $region5: #{lstm_2in_1out_forward.1} parent=1 // pred_fallthru
      _
    // Predicated region
    $region6: #{lstm_2in_1out_forward.1} parent=1 // pred_check
      _
    $region7: #{lstm_2in_1out_forward.1} parent=1 // pred_check_branch
      %11 = sbr.rel (0) target = $region9
    $region8: #{lstm_2in_1out_forward.1} parent=1 // pred_region
      %s13 = ssub.s32 4608, 4608
      %14 = vsyncadd [#allocation3], %s13
      %s15 = sshll.u32 [#allocation2], 4
      %s16 = int_to_ptr.vmem [resolvable:$true] %s15
      %21 = dma.hbm_to_vmem [thread:$0]  %s1, 4608, %s16, [#allocation3], 128, 128, 8
    $region9: #{lstm_2in_1out_forward.1} parent=1 // pred_fallthru
      _
    // Predicated region
    $region10: #{lstm_2in_1out_forward.1} parent=1 // pred_check
      _
    $region11: #{lstm_2in_1out_forward.1} parent=1 // pred_check_branch
      %23 = sbr.rel (0) target = $region13
    $region12: #{lstm_2in_1out_forward.1} parent=1 // pred_region
      %24 = dma.done [#allocation3], 4608
    $region13: #{lstm_2in_1out_forward.1} parent=1 // pred_fallthru
      _
    %v25 = vld [vmem:[#allocation2] sm:$0xff]
    %v26 = vld [vmem:[#allocation2 + $0x8] sm:$0xff]
    %v27 = vld [vmem:[#allocation2 + $0x10] sm:$0xff]
    %v28 = vld [vmem:[#allocation2 + $0x18] sm:$0xff]
    %v29 = vld [vmem:[#allocation2 + $0x20] sm:$0xff]
    %v30 = vld [vmem:[#allocation2 + $0x28] sm:$0xff]
    %v31 = vld [vmem:[#allocation2 + $0x30] sm:$0x3]
    %v32 = vld [vmem:[#allocation2 + $0x38] sm:$0xff]
    %v33 = vld [vmem:[#allocation2 + $0x40] sm:$0xf]
    %v34 = vld [vmem:[#allocation2 + $0x48] sm:$0x1]
    %v35 = vld [vmem:[#allocation2 + $0x50] sm:$0xff]
    %v36 = vld [vmem:[#allocation2 + $0x58] sm:$0xff]
    %v37 = vld [vmem:[#allocation2 + $0x60] sm:$0xff]
    %v38 = vld [vmem:[#allocation2 + $0x68] sm:$0xff]
    %v39 = vld [vmem:[#allocation2 + $0x70] sm:$0xff]
    %v40 = vld [vmem:[#allocation2 + $0x78] sm:$0xff]
    %v41 = vld [vmem:[#allocation2 + $0x80] sm:$0xff]
    %v42 = vld [vmem:[#allocation2 + $0x88] sm:$0xff]
    %v43 = vld [vmem:[#allocation2 + $0x90] sm:$0x1]
    %v44 = vld [vmem:[#allocation2 + $0x98] sm:$0xff]
    %v45 = vld [vmem:[#allocation2 + $0xa0] sm:$0xff]
    %v46 = vld [vmem:[#allocation2 + $0xa8] sm:$0xff]
    %v47 = vld [vmem:[#allocation2 + $0xb0] sm:$0xff]
    %v48 = vld [vmem:[#allocation2 + $0xb8] sm:$0xff]
    %v49 = vld [vmem:[#allocation2 + $0xc0] sm:$0xff]
    %v50 = vld [vmem:[#allocation2 + $0xc8] sm:$0xff]
    %v51 = vld [vmem:[#allocation2 + $0xd0] sm:$0xff]
    %v52 = vld [vmem:[#allocation2 + $0xd8] sm:$0xff]
    %v53 = vld [vmem:[#allocation2 + $0xe0] sm:$0xff]
    %v54 = vld [vmem:[#allocation2 + $0xe8] sm:$0xff]
    %v55 = vld [vmem:[#allocation2 + $0xf0] sm:$0xff]
    %v56 = vld [vmem:[#allocation2 + $0xf8] sm:$0xff]
    %v57 = vld [vmem:[#allocation2 + $0x100] sm:$0xff]
    %v58 = vld [vmem:[#allocation2 + $0x108] sm:$0xff]
    %v59 = vld [vmem:[#allocation2 + $0x110] sm:$0xff]
    %v60 = vld [vmem:[#allocation2 + $0x118] sm:$0x1]
    %v61 = vld [vmem:[%s0] sm:$0xff]
    %v62 = vld [vmem:[%s0 + $0x8] sm:$0xff]
    %v63 = vld [vmem:[%s0 + $0x10] sm:$0xff]
    %v64 = vld [vmem:[%s0 + $0x18] sm:$0xff]
    %v65 = vld [vmem:[%s0 + $0x20] sm:$0xff]
    %v66 = vld [vmem:[%s0 + $0x28] sm:$0xff]
    %v67 = vld [vmem:[%s0 + $0x30] sm:$0xff]
    %v68 = vld [vmem:[%s0 + $0x38] sm:$0xff]
    %v69 = vlaneseq
    %v70 = vand.u32 %v69, 127
    %71 = vset.pattern.permute.xlu0 0
    %72 = vperm.xlu0 %71, %v61
    %v73 = vpop.permute.xlu0 %72
    %74 = vset.pattern.permute.xlu0 0
    %75 = vperm.xlu0 %74, %v62
    %v76 = vpop.permute.xlu0 %75
    %77 = vset.pattern.permute.xlu0 0
    %78 = vperm.xlu0 %77, %v63
    %v79 = vpop.permute.xlu0 %78
    %80 = vset.pattern.permute.xlu0 0
    %81 = vperm.xlu0 %80, %v64
    %v82 = vpop.permute.xlu0 %81
    %83 = vset.pattern.permute.xlu0 0
    %84 = vperm.xlu0 %83, %v65
    %v85 = vpop.permute.xlu0 %84
    %86 = vset.pattern.permute.xlu0 0
    %87 = vperm.xlu0 %86, %v66
    %v88 = vpop.permute.xlu0 %87
    %89 = vset.pattern.permute.xlu0 0
    %90 = vperm.xlu0 %89, %v67
    %v91 = vpop.permute.xlu0 %90
    %92 = vset.pattern.permute.xlu0 0
    %93 = vperm.xlu0 %92, %v68
    %v94 = vpop.permute.xlu0 %93
    %vm95 = vcmp.eq.s32.totalorder %v73, %v70
    %vm96 = vcmp.eq.s32.totalorder %v76, %v70
    %vm97 = vcmp.eq.s32.totalorder %v79, %v70
    %vm98 = vcmp.eq.s32.totalorder %v82, %v70
    %vm99 = vcmp.eq.s32.totalorder %v85, %v70
    %vm100 = vcmp.eq.s32.totalorder %v88, %v70
    %vm101 = vcmp.eq.s32.totalorder %v91, %v70
    %vm102 = vcmp.eq.s32.totalorder %v94, %v70
    %v103 = vsel %vm95, 1.0, 0.0
    %v104 = vsel %vm96, 1.0, 0.0
    %v105 = vsel %vm97, 1.0, 0.0
    %v106 = vsel %vm98, 1.0, 0.0
    %v107 = vsel %vm99, 1.0, 0.0
    %v108 = vsel %vm100, 1.0, 0.0
    %v109 = vsel %vm101, 1.0, 0.0
    %v110 = vsel %vm102, 1.0, 0.0
    %111 = vset.pattern.permute.xlu0 1
    %112 = vperm.xlu0 %111, %v61
    %v113 = vpop.permute.xlu0 %112
    %114 = vset.pattern.permute.xlu0 1
    %115 = vperm.xlu0 %114, %v62
    %v116 = vpop.permute.xlu0 %115
    %117 = vset.pattern.permute.xlu0 1
    %118 = vperm.xlu0 %117, %v63
    %v119 = vpop.permute.xlu0 %118
    %120 = vset.pattern.permute.xlu0 1
    %121 = vperm.xlu0 %120, %v64
    %v122 = vpop.permute.xlu0 %121
    %123 = vset.pattern.permute.xlu0 1
    %124 = vperm.xlu0 %123, %v65
    %v125 = vpop.permute.xlu0 %124
    %126 = vset.pattern.permute.xlu0 1
    %127 = vperm.xlu0 %126, %v66
    %v128 = vpop.permute.xlu0 %127
    %129 = vset.pattern.permute.xlu0 1
    %130 = vperm.xlu0 %129, %v67
    %v131 = vpop.permute.xlu0 %130
    %132 = vset.pattern.permute.xlu0 1
    %133 = vperm.xlu0 %132, %v68
    %v134 = vpop.permute.xlu0 %133
    %vm135 = vcmp.eq.s32.totalorder %v113, %v70
    %vm136 = vcmp.eq.s32.totalorder %v116, %v70
    %vm137 = vcmp.eq.s32.totalorder %v119, %v70
    %vm138 = vcmp.eq.s32.totalorder %v122, %v70
    %vm139 = vcmp.eq.s32.totalorder %v125, %v70
    %vm140 = vcmp.eq.s32.totalorder %v128, %v70
    %vm141 = vcmp.eq.s32.totalorder %v131, %v70
    %vm142 = vcmp.eq.s32.totalorder %v134, %v70
    %v143 = vsel %vm135, 1.0, 0.0
    %v144 = vsel %vm136, 1.0, 0.0
    %v145 = vsel %vm137, 1.0, 0.0
    %v146 = vsel %vm138, 1.0, 0.0
    %v147 = vsel %vm139, 1.0, 0.0
    %v148 = vsel %vm140, 1.0, 0.0
    %v149 = vsel %vm141, 1.0, 0.0
    %v150 = vsel %vm142, 1.0, 0.0
    %vm151 = vcmask 97280
    %v153 = vsel %vm151, %v143, 0
    %v156 = vsel %vm151, %v144, 0
    %v159 = vsel %vm151, %v145, 0
    %v162 = vsel %vm151, %v146, 0
    %v165 = vsel %vm151, %v147, 0
    %v168 = vsel %vm151, %v148, 0
    %v171 = vsel %vm151, %v149, 0
    %v174 = vsel %vm151, %v150, 0
    %vm176 = vcmask 1043456
    %v178 = vsel %vm176, %v33, 0
    %180 = vmatprep.subr.mxu0 0.0
    %181 = vmatpush1.msra.mxu0 %v32
    %182 = vmatprep.subr.mxu0 0.0
    %183 = vmatpush1.msra.mxu0 %v178
    %184 = vmatprep.subr.mxu0 0.0
    %185 = vmatpush1.msra.mxu0 0.0
    %186 = vmatprep.subr.mxu0 0.0
    %187 = vmatpush1.msra.mxu0 0.0
    %188 = vmatprep.subr.mxu0 0.0
    %189 = vmatpush1.msra.mxu0 0.0
    %190 = vmatprep.subr.mxu0 0.0
    %191 = vmatpush1.msra.mxu0 0.0
    %192 = vmatprep.subr.mxu0 0.0
    %193 = vmatpush1.msra.mxu0 0.0
    %194 = vmatprep.subr.mxu0 0.0
    %195 = vmatpush1.msra.mxu0 0.0
    %196 = vmatprep.subr.mxu0 0.0
    %197 = vmatpush1.msra.mxu0 0.0
    %198 = vmatprep.subr.mxu0 0.0
    %199 = vmatpush1.msra.mxu0 0.0
    %200 = vmatprep.subr.mxu0 0.0
    %201 = vmatpush1.msra.mxu0 0.0
    %202 = vmatprep.subr.mxu0 0.0
    %203 = vmatpush1.msra.mxu0 0.0
    %204 = vmatprep.subr.mxu0 0.0
    %205 = vmatpush1.msra.mxu0 0.0
    %206 = vmatprep.subr.mxu0 0.0
    %207 = vmatpush1.msra.mxu0 0.0
    %208 = vmatprep.subr.mxu0 0.0
    %209 = vmatpush1.msra.mxu0 0.0
    %210 = vmatprep.subr.mxu0 0.0
    %211 = vmatpush1.msra.mxu0 0.0
    %212 = vmatprep.subr.mxu0 0.0
    %213 = vmatpush1.msra.mxu0 0.0
    %214 = vmatprep.subr.mxu0 0.0
    %215 = vmatpush1.msra.mxu0 0.0
    %216 = vmatprep.subr.mxu0 0.0
    %217 = vmatpush1.msra.mxu0 0.0
    %218 = vmatprep.subr.mxu0 0.0
    %219 = vmatpush1.msra.mxu0 0.0
    %220 = vmatprep.subr.mxu0 0.0
    %221 = vmatpush1.msra.mxu0 0.0
    %222 = vmatprep.subr.mxu0 0.0
    %223 = vmatpush1.msra.mxu0 0.0
    %224 = vmatprep.subr.mxu0 0.0
    %225 = vmatpush1.msra.mxu0 0.0
    %226 = vmatprep.subr.mxu0 0.0
    %227 = vmatpush1.msra.mxu0 0.0
    %228 = vmatprep.subr.mxu0 0.0
    %229 = vmatpush1.msra.mxu0 0.0
    %230 = vmatprep.subr.mxu0 0.0
    %231 = vmatpush1.msra.mxu0 0.0
    %232 = vmatprep.subr.mxu0 0.0
    %233 = vmatpush1.msra.mxu0 0.0
    %234 = vmatprep.subr.mxu0 0.0
    %235 = vmatpush1.msra.mxu0 0.0
    %236 = vmatprep.subr.mxu0 0.0
    %237 = vmatpush1.msra.mxu0 0.0
    %238 = vmatprep.subr.mxu0 0.0
    %239 = vmatpush1.msra.mxu0 0.0
    %240 = vmatprep.subr.mxu0 0.0
    %241 = vmatpush1.msra.mxu0 0.0
    %242 = vmatprep.subr.mxu0 0.0
    %243 = vmatpush1.msra.mxu0 0.0
    %244 = vmatprep.mubr.f32.mxu0 0.0
    %245 = vmatmul.mubr.f32.gmra.mrb[0].mxu0 %v153
    %v246 = vpop.f32.mrb[0].mxu0
    %v247 = vadd.f32 0.0, %v246
    %v248 = vpop.f32.mrb[0].mxu0
    %249 = vmatprep.mubr.f32.mxu0 0.0
    %250 = vmatmul.mubr.f32.gmra.mrb[0].mxu0 %v156
    %v251 = vpop.f32.mrb[0].mxu0
    %v252 = vadd.f32 0.0, %v251
    %v253 = vpop.f32.mrb[0].mxu0
    %254 = vmatprep.mubr.f32.mxu0 0.0
    %255 = vmatmul.mubr.f32.gmra.mrb[0].mxu0 %v159
    %v256 = vpop.f32.mrb[0].mxu0
    %v257 = vadd.f32 0.0, %v256
    %v258 = vpop.f32.mrb[0].mxu0
    %259 = vmatprep.mubr.f32.mxu0 0.0
    %260 = vmatmul.mubr.f32.gmra.mrb[0].mxu0 %v162
    %v261 = vpop.f32.mrb[0].mxu0
    %v262 = vadd.f32 0.0, %v261
    %v263 = vpop.f32.mrb[0].mxu0
    %264 = vmatprep.mubr.f32.mxu0 0.0
    %265 = vmatmul.mubr.f32.gmra.mrb[0].mxu0 %v165
    %v266 = vpop.f32.mrb[0].mxu0
    %v267 = vadd.f32 0.0, %v266
    %v268 = vpop.f32.mrb[0].mxu0
    %269 = vmatprep.mubr.f32.mxu0 0.0
    %270 = vmatmul.mubr.f32.gmra.mrb[0].mxu0 %v168
    %v271 = vpop.f32.mrb[0].mxu0
    %v272 = vadd.f32 0.0, %v271
    %v273 = vpop.f32.mrb[0].mxu0
    %274 = vmatprep.mubr.f32.mxu0 0.0
    %275 = vmatmul.mubr.f32.gmra.mrb[0].mxu0 %v171
    %v276 = vpop.f32.mrb[0].mxu0
    %v277 = vadd.f32 0.0, %v276
    %v278 = vpop.f32.mrb[0].mxu0
    %279 = vmatprep.mubr.f32.mxu0 0.0
    %280 = vmatmul.mubr.f32.gmra.mrb[0].mxu0 %v174
    %v281 = vpop.f32.mrb[0].mxu0
    %v282 = vadd.f32 0.0, %v281
    %v283 = vpop.f32.mrb[0].mxu0
    %284 = vdwg.mxu0
    %vm285 = vcmask 408576
    %v287 = vsel %vm285, %v103, 0
    %v290 = vsel %vm285, %v104, 0
    %v293 = vsel %vm285, %v105, 0
    %v296 = vsel %vm285, %v106, 0
    %v299 = vsel %vm285, %v107, 0
    %v302 = vsel %vm285, %v108, 0
    %v305 = vsel %vm285, %v109, 0
    %v308 = vsel %vm285, %v110, 0
    %vm310 = vcmask 1041408
    %v312 = vsel %vm310, %v31, 0
    %314 = vmatprep.subr.mxu0 0.0
    %315 = vmatpush1.msra.mxu0 %v25
    %316 = vmatprep.subr.mxu0 0.0
    %317 = vmatpush1.msra.mxu0 %v26
    %318 = vmatprep.subr.mxu0 0.0
    %319 = vmatpush1.msra.mxu0 %v27
    %320 = vmatprep.subr.mxu0 0.0
    %321 = vmatpush1.msra.mxu0 %v28
    %322 = vmatprep.subr.mxu0 0.0
    %323 = vmatpush1.msra.mxu0 %v29
    %324 = vmatprep.subr.mxu0 0.0
    %325 = vmatpush1.msra.mxu0 %v30
    %326 = vmatprep.subr.mxu0 0.0
    %327 = vmatpush1.msra.mxu0 %v312
    %328 = vmatprep.subr.mxu0 0.0
    %329 = vmatpush1.msra.mxu0 0.0
    %330 = vmatprep.subr.mxu0 0.0
    %331 = vmatpush1.msra.mxu0 0.0
    %332 = vmatprep.subr.mxu0 0.0
    %333 = vmatpush1.msra.mxu0 0.0
    %334 = vmatprep.subr.mxu0 0.0
    %335 = vmatpush1.msra.mxu0 0.0
    %336 = vmatprep.subr.mxu0 0.0
    %337 = vmatpush1.msra.mxu0 0.0
    %338 = vmatprep.subr.mxu0 0.0
    %339 = vmatpush1.msra.mxu0 0.0
    %340 = vmatprep.subr.mxu0 0.0
    %341 = vmatpush1.msra.mxu0 0.0
    %342 = vmatprep.subr.mxu0 0.0
    %343 = vmatpush1.msra.mxu0 0.0
    %344 = vmatprep.subr.mxu0 0.0
    %345 = vmatpush1.msra.mxu0 0.0
    %346 = vmatprep.subr.mxu0 0.0
    %347 = vmatpush1.msra.mxu0 0.0
    %348 = vmatprep.subr.mxu0 0.0
    %349 = vmatpush1.msra.mxu0 0.0
    %350 = vmatprep.subr.mxu0 0.0
    %351 = vmatpush1.msra.mxu0 0.0
    %352 = vmatprep.subr.mxu0 0.0
    %353 = vmatpush1.msra.mxu0 0.0
    %354 = vmatprep.subr.mxu0 0.0
    %355 = vmatpush1.msra.mxu0 0.0
    %356 = vmatprep.subr.mxu0 0.0
    %357 = vmatpush1.msra.mxu0 0.0
    %358 = vmatprep.subr.mxu0 0.0
    %359 = vmatpush1.msra.mxu0 0.0
    %360 = vmatprep.subr.mxu0 0.0
    %361 = vmatpush1.msra.mxu0 0.0
    %362 = vmatprep.subr.mxu0 0.0
    %363 = vmatpush1.msra.mxu0 0.0
    %364 = vmatprep.subr.mxu0 0.0
    %365 = vmatpush1.msra.mxu0 0.0
    %366 = vmatprep.subr.mxu0 0.0
    %367 = vmatpush1.msra.mxu0 0.0
    %368 = vmatprep.subr.mxu0 0.0
    %369 = vmatpush1.msra.mxu0 0.0
    %370 = vmatprep.subr.mxu0 0.0
    %371 = vmatpush1.msra.mxu0 0.0
    %372 = vmatprep.subr.mxu0 0.0
    %373 = vmatpush1.msra.mxu0 0.0
    %374 = vmatprep.subr.mxu0 0.0
    %375 = vmatpush1.msra.mxu0 0.0
    %376 = vmatprep.subr.mxu0 0.0
    %377 = vmatpush1.msra.mxu0 0.0
    %378 = vmatprep.mubr.f32.mxu0 0.0
    %379 = vmatmul.mubr.f32.gmra.mrb[0].mxu0 %v287
    %v380 = vpop.f32.mrb[0].mxu0
    %v381 = vadd.f32 %v247, %v380
    %v382 = vpop.f32.mrb[0].mxu0
    %383 = vmatprep.mubr.f32.mxu0 0.0
    %384 = vmatmul.mubr.f32.gmra.mrb[0].mxu0 %v290
    %v385 = vpop.f32.mrb[0].mxu0
    %v386 = vadd.f32 %v252, %v385
    %v387 = vpop.f32.mrb[0].mxu0
    %388 = vmatprep.mubr.f32.mxu0 0.0
    %389 = vmatmul.mubr.f32.gmra.mrb[0].mxu0 %v293
    %v390 = vpop.f32.mrb[0].mxu0
    %v391 = vadd.f32 %v257, %v390
    %v392 = vpop.f32.mrb[0].mxu0
    %393 = vmatprep.mubr.f32.mxu0 0.0
    %394 = vmatmul.mubr.f32.gmra.mrb[0].mxu0 %v296
    %v395 = vpop.f32.mrb[0].mxu0
    %v396 = vadd.f32 %v262, %v395
    %v397 = vpop.f32.mrb[0].mxu0
    %398 = vmatprep.mubr.f32.mxu0 0.0
    %399 = vmatmul.mubr.f32.gmra.mrb[0].mxu0 %v299
    %v400 = vpop.f32.mrb[0].mxu0
    %v401 = vadd.f32 %v267, %v400
    %v402 = vpop.f32.mrb[0].mxu0
    %403 = vmatprep.mubr.f32.mxu0 0.0
    %404 = vmatmul.mubr.f32.gmra.mrb[0].mxu0 %v302
    %v405 = vpop.f32.mrb[0].mxu0
    %v406 = vadd.f32 %v272, %v405
    %v407 = vpop.f32.mrb[0].mxu0
    %408 = vmatprep.mubr.f32.mxu0 0.0
    %409 = vmatmul.mubr.f32.gmra.mrb[0].mxu0 %v305
    %v410 = vpop.f32.mrb[0].mxu0
    %v411 = vadd.f32 %v277, %v410
    %v412 = vpop.f32.mrb[0].mxu0
    %413 = vmatprep.mubr.f32.mxu0 0.0
    %414 = vmatmul.mubr.f32.gmra.mrb[0].mxu0 %v308
    %v415 = vpop.f32.mrb[0].mxu0
    %v416 = vadd.f32 %v282, %v415
    %v417 = vpop.f32.mrb[0].mxu0
    %418 = vdwg.mxu0
    %v419 = vlaneseq
    %v420 = vshrl.u32 %v419, 7
    %v421 = vsub.s32 0, %v420
    %v422 = vrot.slane %v34, %v421
    %v423 = vadd.f32 %v381, %v422
    %v424 = vadd.f32 %v386, %v422
    %v425 = vadd.f32 %v391, %v422
    %v426 = vadd.f32 %v396, %v422
    %v427 = vadd.f32 %v401, %v422
    %v428 = vadd.f32 %v406, %v422
    %v429 = vadd.f32 %v411, %v422
    %v430 = vadd.f32 %v416, %v422
    %vm431 = vcmask 261120
    %v433 = vsel %vm431, 0.0, 0
    %435 = vmatprep.subr.mxu0 0.0
    %436 = vmatpush1.msra.mxu0 %v35
    %437 = vmatprep.subr.mxu0 0.0
    %438 = vmatpush1.msra.mxu0 %v36
    %439 = vmatprep.subr.mxu0 0.0
    %440 = vmatpush1.msra.mxu0 %v37
    %441 = vmatprep.subr.mxu0 0.0
    %442 = vmatpush1.msra.mxu0 %v38
    %443 = vmatprep.subr.mxu0 0.0
    %444 = vmatpush1.msra.mxu0 0.0
    %445 = vmatprep.subr.mxu0 0.0
    %446 = vmatpush1.msra.mxu0 0.0
    %447 = vmatprep.subr.mxu0 0.0
    %448 = vmatpush1.msra.mxu0 0.0
    %449 = vmatprep.subr.mxu0 0.0
    %450 = vmatpush1.msra.mxu0 0.0
    %451 = vmatprep.subr.mxu0 0.0
    %452 = vmatpush1.msra.mxu0 0.0
    %453 = vmatprep.subr.mxu0 0.0
    %454 = vmatpush1.msra.mxu0 0.0
    %455 = vmatprep.subr.mxu0 0.0
    %456 = vmatpush1.msra.mxu0 0.0
    %457 = vmatprep.subr.mxu0 0.0
    %458 = vmatpush1.msra.mxu0 0.0
    %459 = vmatprep.subr.mxu0 0.0
    %460 = vmatpush1.msra.mxu0 0.0
    %461 = vmatprep.subr.mxu0 0.0
    %462 = vmatpush1.msra.mxu0 0.0
    %463 = vmatprep.subr.mxu0 0.0
    %464 = vmatpush1.msra.mxu0 0.0
    %465 = vmatprep.subr.mxu0 0.0
    %466 = vmatpush1.msra.mxu0 0.0
    %467 = vmatprep.subr.mxu0 0.0
    %468 = vmatpush1.msra.mxu0 0.0
    %469 = vmatprep.subr.mxu0 0.0
    %470 = vmatpush1.msra.mxu0 0.0
    %471 = vmatprep.subr.mxu0 0.0
    %472 = vmatpush1.msra.mxu0 0.0
    %473 = vmatprep.subr.mxu0 0.0
    %474 = vmatpush1.msra.mxu0 0.0
    %475 = vmatprep.subr.mxu0 0.0
    %476 = vmatpush1.msra.mxu0 0.0
    %477 = vmatprep.subr.mxu0 0.0
    %478 = vmatpush1.msra.mxu0 0.0
    %479 = vmatprep.subr.mxu0 0.0
    %480 = vmatpush1.msra.mxu0 0.0
    %481 = vmatprep.subr.mxu0 0.0
    %482 = vmatpush1.msra.mxu0 0.0
    %483 = vmatprep.subr.mxu0 0.0
    %484 = vmatpush1.msra.mxu0 0.0
    %485 = vmatprep.subr.mxu0 0.0
    %486 = vmatpush1.msra.mxu0 0.0
    %487 = vmatprep.subr.mxu0 0.0
    %488 = vmatpush1.msra.mxu0 0.0
    %489 = vmatprep.subr.mxu0 0.0
    %490 = vmatpush1.msra.mxu0 0.0
    %491 = vmatprep.subr.mxu0 0.0
    %492 = vmatpush1.msra.mxu0 0.0
    %493 = vmatprep.subr.mxu0 0.0
    %494 = vmatpush1.msra.mxu0 0.0
    %495 = vmatprep.subr.mxu0 0.0
    %496 = vmatpush1.msra.mxu0 0.0
    %497 = vmatprep.subr.mxu0 0.0
    %498 = vmatpush1.msra.mxu0 0.0
    %499 = vmatprep.mubr.f32.mxu0 0.0
    %500 = vmatmul.mubr.f32.gmra.mrb[0].mxu0 %v433
    %v501 = vpop.f32.mrb[0].mxu0
    %v502 = vadd.f32 0.0, %v501
    %v503 = vpop.f32.mrb[0].mxu0
    %504 = vdwg.mxu0
    %v505 = vadd.f32 %v423, %v502
    %v506 = vxor.u32 %v505, 2147483648
    %v507 = vmul.f32 %v506, 1.442695
    %v508 = vpow.pop %v507
    %v509 = vadd.f32 %v508, 1.0
    %v510 = vrcp.pop %v509
    %v511 = vmul.f32 1.0, %v510
    %v512 = vtanh.pop %v505
    %v513 = vmul.f32 %v511, 0.0
    %515 = vrot.lane.b32.xlu0 %v512, 64
    %v516 = vpop.permute.xlu0 %515
    %v518 = vmul.f32 %v511, %v516
    %520 = vrot.lane.b32.xlu0 %v518, 32
    %v521 = vpop.permute.xlu0 %520
    %v523 = vadd.f32 %v513, %v521
    %v524 = vtanh.pop %v523
    %526 = vrot.lane.b32.xlu0 %v524, 64
    %v527 = vpop.permute.xlu0 %526
    %v529 = vmul.f32 %v511, %v527
    %531 = vrot.lane.b32.xlu0 %v529, 32
    %v532 = vpop.permute.xlu0 %531
    %v533 = vsel %vm431, %v532, 0
    %535 = vmatprep.subr.mxu0 0.0
    %536 = vmatpush1.msra.mxu0 %v35
    %537 = vmatprep.subr.mxu0 0.0
    %538 = vmatpush1.msra.mxu0 %v36
    %539 = vmatprep.subr.mxu0 0.0
    %540 = vmatpush1.msra.mxu0 %v37
    %541 = vmatprep.subr.mxu0 0.0
    %542 = vmatpush1.msra.mxu0 %v38
    %543 = vmatprep.subr.mxu0 0.0
    %544 = vmatpush1.msra.mxu0 0.0
    %545 = vmatprep.subr.mxu0 0.0
    %546 = vmatpush1.msra.mxu0 0.0
    %547 = vmatprep.subr.mxu0 0.0
    %548 = vmatpush1.msra.mxu0 0.0
    %549 = vmatprep.subr.mxu0 0.0
    %550 = vmatpush1.msra.mxu0 0.0
    %551 = vmatprep.subr.mxu0 0.0
    %552 = vmatpush1.msra.mxu0 0.0
    %553 = vmatprep.subr.mxu0 0.0
    %554 = vmatpush1.msra.mxu0 0.0
    %555 = vmatprep.subr.mxu0 0.0
    %556 = vmatpush1.msra.mxu0 0.0
    %557 = vmatprep.subr.mxu0 0.0
    %558 = vmatpush1.msra.mxu0 0.0
    %559 = vmatprep.subr.mxu0 0.0
    %560 = vmatpush1.msra.mxu0 0.0
    %561 = vmatprep.subr.mxu0 0.0
    %562 = vmatpush1.msra.mxu0 0.0
    %563 = vmatprep.subr.mxu0 0.0
    %564 = vmatpush1.msra.mxu0 0.0
    %565 = vmatprep.subr.mxu0 0.0
    %566 = vmatpush1.msra.mxu0 0.0
    %567 = vmatprep.subr.mxu0 0.0
    %568 = vmatpush1.msra.mxu0 0.0
    %569 = vmatprep.subr.mxu0 0.0
    %570 = vmatpush1.msra.mxu0 0.0
    %571 = vmatprep.subr.mxu0 0.0
    %572 = vmatpush1.msra.mxu0 0.0
    %573 = vmatprep.subr.mxu0 0.0
    %574 = vmatpush1.msra.mxu0 0.0
    %575 = vmatprep.subr.mxu0 0.0
    %576 = vmatpush1.msra.mxu0 0.0
    %577 = vmatprep.subr.mxu0 0.0
    %578 = vmatpush1.msra.mxu0 0.0
    %579 = vmatprep.subr.mxu0 0.0
    %580 = vmatpush1.msra.mxu0 0.0
    %581 = vmatprep.subr.mxu0 0.0
    %582 = vmatpush1.msra.mxu0 0.0
    %583 = vmatprep.subr.mxu0 0.0
    %584 = vmatpush1.msra.mxu0 0.0
    %585 = vmatprep.subr.mxu0 0.0
    %586 = vmatpush1.msra.mxu0 0.0
    %587 = vmatprep.subr.mxu0 0.0
    %588 = vmatpush1.msra.mxu0 0.0
    %589 = vmatprep.subr.mxu0 0.0
    %590 = vmatpush1.msra.mxu0 0.0
    %591 = vmatprep.subr.mxu0 0.0
    %592 = vmatpush1.msra.mxu0 0.0
    %593 = vmatprep.subr.mxu0 0.0
    %594 = vmatpush1.msra.mxu0 0.0
    %595 = vmatprep.subr.mxu0 0.0
    %596 = vmatpush1.msra.mxu0 0.0
    %597 = vmatprep.subr.mxu0 0.0
    %598 = vmatpush1.msra.mxu0 0.0
    %599 = vmatprep.mubr.f32.mxu0 0.0
    %600 = vmatmul.mubr.f32.gmra.mrb[0].mxu0 %v533
    %v601 = vpop.f32.mrb[0].mxu0
    %v602 = vadd.f32 0.0, %v601
    %v603 = vpop.f32.mrb[0].mxu0
    %604 = vdwg.mxu0
    %v605 = vadd.f32 %v424, %v602
    %v606 = vxor.u32 %v605, 2147483648
    %v607 = vmul.f32 %v606, 1.442695
    %v608 = vpow.pop %v607
    %v609 = vadd.f32 %v608, 1.0
    %v610 = vrcp.pop %v609
    %v611 = vmul.f32 1.0, %v610
    %v612 = vtanh.pop %v605
    %v613 = vmul.f32 %v611, %v523
    %615 = vrot.lane.b32.xlu0 %v612, 64
    %v616 = vpop.permute.xlu0 %615
    %v618 = vmul.f32 %v611, %v616
    %620 = vrot.lane.b32.xlu0 %v618, 32
    %v621 = vpop.permute.xlu0 %620
    %v623 = vadd.f32 %v613, %v621
    %v624 = vtanh.pop %v623
    %626 = vrot.lane.b32.xlu0 %v624, 64
    %v627 = vpop.permute.xlu0 %626
    %v629 = vmul.f32 %v611, %v627
    %631 = vrot.lane.b32.xlu0 %v629, 32
    %v632 = vpop.permute.xlu0 %631
    %v633 = vsel %vm431, %v632, 0
    %635 = vmatprep.subr.mxu0 0.0
    %636 = vmatpush1.msra.mxu0 %v35
    %637 = vmatprep.subr.mxu0 0.0
    %638 = vmatpush1.msra.mxu0 %v36
    %639 = vmatprep.subr.mxu0 0.0
    %640 = vmatpush1.msra.mxu0 %v37
    %641 = vmatprep.subr.mxu0 0.0
    %642 = vmatpush1.msra.mxu0 %v38
    %643 = vmatprep.subr.mxu0 0.0
    %644 = vmatpush1.msra.mxu0 0.0
    %645 = vmatprep.subr.mxu0 0.0
    %646 = vmatpush1.msra.mxu0 0.0
    %647 = vmatprep.subr.mxu0 0.0
    %648 = vmatpush1.msra.mxu0 0.0
    %649 = vmatprep.subr.mxu0 0.0
    %650 = vmatpush1.msra.mxu0 0.0
    %651 = vmatprep.subr.mxu0 0.0
    %652 = vmatpush1.msra.mxu0 0.0
    %653 = vmatprep.subr.mxu0 0.0
    %654 = vmatpush1.msra.mxu0 0.0
    %655 = vmatprep.subr.mxu0 0.0
    %656 = vmatpush1.msra.mxu0 0.0
    %657 = vmatprep.subr.mxu0 0.0
    %658 = vmatpush1.msra.mxu0 0.0
    %659 = vmatprep.subr.mxu0 0.0
    %660 = vmatpush1.msra.mxu0 0.0
    %661 = vmatprep.subr.mxu0 0.0
    %662 = vmatpush1.msra.mxu0 0.0
    %663 = vmatprep.subr.mxu0 0.0
    %664 = vmatpush1.msra.mxu0 0.0
    %665 = vmatprep.subr.mxu0 0.0
    %666 = vmatpush1.msra.mxu0 0.0
    %667 = vmatprep.subr.mxu0 0.0
    %668 = vmatpush1.msra.mxu0 0.0
    %669 = vmatprep.subr.mxu0 0.0
    %670 = vmatpush1.msra.mxu0 0.0
    %671 = vmatprep.subr.mxu0 0.0
    %672 = vmatpush1.msra.mxu0 0.0
    %673 = vmatprep.subr.mxu0 0.0
    %674 = vmatpush1.msra.mxu0 0.0
    %675 = vmatprep.subr.mxu0 0.0
    %676 = vmatpush1.msra.mxu0 0.0
    %677 = vmatprep.subr.mxu0 0.0
    %678 = vmatpush1.msra.mxu0 0.0
    %679 = vmatprep.subr.mxu0 0.0
    %680 = vmatpush1.msra.mxu0 0.0
    %681 = vmatprep.subr.mxu0 0.0
    %682 = vmatpush1.msra.mxu0 0.0
    %683 = vmatprep.subr.mxu0 0.0
    %684 = vmatpush1.msra.mxu0 0.0
    %685 = vmatprep.subr.mxu0 0.0
    %686 = vmatpush1.msra.mxu0 0.0
    %687 = vmatprep.subr.mxu0 0.0
    %688 = vmatpush1.msra.mxu0 0.0
    %689 = vmatprep.subr.mxu0 0.0
    %690 = vmatpush1.msra.mxu0 0.0
    %691 = vmatprep.subr.mxu0 0.0
    %692 = vmatpush1.msra.mxu0 0.0
    %693 = vmatprep.subr.mxu0 0.0
    %694 = vmatpush1.msra.mxu0 0.0
    %695 = vmatprep.subr.mxu0 0.0
    %696 = vmatpush1.msra.mxu0 0.0
    %697 = vmatprep.subr.mxu0 0.0
    %698 = vmatpush1.msra.mxu0 0.0
    %699 = vmatprep.mubr.f32.mxu0 0.0
    %700 = vmatmul.mubr.f32.gmra.mrb[0].mxu0 %v633
    %v701 = vpop.f32.mrb[0].mxu0
    %v702 = vadd.f32 0.0, %v701
    %v703 = vpop.f32.mrb[0].mxu0
    %704 = vdwg.mxu0
    %v705 = vadd.f32 %v425, %v702
    %v706 = vxor.u32 %v705, 2147483648
    %v707 = vmul.f32 %v706, 1.442695
    %v708 = vpow.pop %v707
    %v709 = vadd.f32 %v708, 1.0
    %v710 = vrcp.pop %v709
    %v711 = vmul.f32 1.0, %v710
    %v712 = vtanh.pop %v705
    %v713 = vmul.f32 %v711, %v623
    %715 = vrot.lane.b32.xlu0 %v712, 64
    %v716 = vpop.permute.xlu0 %715
    %v718 = vmul.f32 %v711, %v716
    %720 = vrot.lane.b32.xlu0 %v718, 32
    %v721 = vpop.permute.xlu0 %720
    %v723 = vadd.f32 %v713, %v721
    %v724 = vtanh.pop %v723
    %726 = vrot.lane.b32.xlu0 %v724, 64
    %v727 = vpop.permute.xlu0 %726
    %v729 = vmul.f32 %v711, %v727
    %731 = vrot.lane.b32.xlu0 %v729, 32
    %v732 = vpop.permute.xlu0 %731
    %v733 = vsel %vm431, %v732, 0
    %735 = vmatprep.subr.mxu0 0.0
    %736 = vmatpush1.msra.mxu0 %v35
    %737 = vmatprep.subr.mxu0 0.0
    %738 = vmatpush1.msra.mxu0 %v36
    %739 = vmatprep.subr.mxu0 0.0
    %740 = vmatpush1.msra.mxu0 %v37
    %741 = vmatprep.subr.mxu0 0.0
    %742 = vmatpush1.msra.mxu0 %v38
    %743 = vmatprep.subr.mxu0 0.0
    %744 = vmatpush1.msra.mxu0 0.0
    %745 = vmatprep.subr.mxu0 0.0
    %746 = vmatpush1.msra.mxu0 0.0
    %747 = vmatprep.subr.mxu0 0.0
    %748 = vmatpush1.msra.mxu0 0.0
    %749 = vmatprep.subr.mxu0 0.0
    %750 = vmatpush1.msra.mxu0 0.0
    %751 = vmatprep.subr.mxu0 0.0
    %752 = vmatpush1.msra.mxu0 0.0
    %753 = vmatprep.subr.mxu0 0.0
    %754 = vmatpush1.msra.mxu0 0.0
    %755 = vmatprep.subr.mxu0 0.0
    %756 = vmatpush1.msra.mxu0 0.0
    %757 = vmatprep.subr.mxu0 0.0
    %758 = vmatpush1.msra.mxu0 0.0
    %759 = vmatprep.subr.mxu0 0.0
    %760 = vmatpush1.msra.mxu0 0.0
    %761 = vmatprep.subr.mxu0 0.0
    %762 = vmatpush1.msra.mxu0 0.0
    %763 = vmatprep.subr.mxu0 0.0
    %764 = vmatpush1.msra.mxu0 0.0
    %765 = vmatprep.subr.mxu0 0.0
    %766 = vmatpush1.msra.mxu0 0.0
    %767 = vmatprep.subr.mxu0 0.0
    %768 = vmatpush1.msra.mxu0 0.0
    %769 = vmatprep.subr.mxu0 0.0
    %770 = vmatpush1.msra.mxu0 0.0
    %771 = vmatprep.subr.mxu0 0.0
    %772 = vmatpush1.msra.mxu0 0.0
    %773 = vmatprep.subr.mxu0 0.0
    %774 = vmatpush1.msra.mxu0 0.0
    %775 = vmatprep.subr.mxu0 0.0
    %776 = vmatpush1.msra.mxu0 0.0
    %777 = vmatprep.subr.mxu0 0.0
    %778 = vmatpush1.msra.mxu0 0.0
    %779 = vmatprep.subr.mxu0 0.0
    %780 = vmatpush1.msra.mxu0 0.0
    %781 = vmatprep.subr.mxu0 0.0
    %782 = vmatpush1.msra.mxu0 0.0
    %783 = vmatprep.subr.mxu0 0.0
    %784 = vmatpush1.msra.mxu0 0.0
    %785 = vmatprep.subr.mxu0 0.0
    %786 = vmatpush1.msra.mxu0 0.0
    %787 = vmatprep.subr.mxu0 0.0
    %788 = vmatpush1.msra.mxu0 0.0
    %789 = vmatprep.subr.mxu0 0.0
    %790 = vmatpush1.msra.mxu0 0.0
    %791 = vmatprep.subr.mxu0 0.0
    %792 = vmatpush1.msra.mxu0 0.0
    %793 = vmatprep.subr.mxu0 0.0
    %794 = vmatpush1.msra.mxu0 0.0
    %795 = vmatprep.subr.mxu0 0.0
    %796 = vmatpush1.msra.mxu0 0.0
    %797 = vmatprep.subr.mxu0 0.0
    %798 = vmatpush1.msra.mxu0 0.0
    %799 = vmatprep.mubr.f32.mxu0 0.0
    %800 = vmatmul.mubr.f32.gmra.mrb[0].mxu0 %v733
    %v801 = vpop.f32.mrb[0].mxu0
    %v802 = vadd.f32 0.0, %v801
    %v803 = vpop.f32.mrb[0].mxu0
    %804 = vdwg.mxu0
    %v805 = vadd.f32 %v426, %v802
    %v806 = vxor.u32 %v805, 2147483648
    %v807 = vmul.f32 %v806, 1.442695
    %v808 = vpow.pop %v807
    %v809 = vadd.f32 %v808, 1.0
    %v810 = vrcp.pop %v809
    %v811 = vmul.f32 1.0, %v810
    %v812 = vtanh.pop %v805
    %v813 = vmul.f32 %v811, %v723
    %815 = vrot.lane.b32.xlu0 %v812, 64
    %v816 = vpop.permute.xlu0 %815
    %v818 = vmul.f32 %v811, %v816
    %820 = vrot.lane.b32.xlu0 %v818, 32
    %v821 = vpop.permute.xlu0 %820
    %v823 = vadd.f32 %v813, %v821
    %v824 = vtanh.pop %v823
    %826 = vrot.lane.b32.xlu0 %v824, 64
    %v827 = vpop.permute.xlu0 %826
    %v829 = vmul.f32 %v811, %v827
    %831 = vrot.lane.b32.xlu0 %v829, 32
    %v832 = vpop.permute.xlu0 %831
    %v833 = vsel %vm431, %v832, 0
    %835 = vmatprep.subr.mxu0 0.0
    %836 = vmatpush1.msra.mxu0 %v35
    %837 = vmatprep.subr.mxu0 0.0
    %838 = vmatpush1.msra.mxu0 %v36
    %839 = vmatprep.subr.mxu0 0.0
    %840 = vmatpush1.msra.mxu0 %v37
    %841 = vmatprep.subr.mxu0 0.0
    %842 = vmatpush1.msra.mxu0 %v38
    %843 = vmatprep.subr.mxu0 0.0
    %844 = vmatpush1.msra.mxu0 0.0
    %845 = vmatprep.subr.mxu0 0.0
    %846 = vmatpush1.msra.mxu0 0.0
    %847 = vmatprep.subr.mxu0 0.0
    %848 = vmatpush1.msra.mxu0 0.0
    %849 = vmatprep.subr.mxu0 0.0
    %850 = vmatpush1.msra.mxu0 0.0
    %851 = vmatprep.subr.mxu0 0.0
    %852 = vmatpush1.msra.mxu0 0.0
    %853 = vmatprep.subr.mxu0 0.0
    %854 = vmatpush1.msra.mxu0 0.0
    %855 = vmatprep.subr.mxu0 0.0
    %856 = vmatpush1.msra.mxu0 0.0
    %857 = vmatprep.subr.mxu0 0.0
    %858 = vmatpush1.msra.mxu0 0.0
    %859 = vmatprep.subr.mxu0 0.0
    %860 = vmatpush1.msra.mxu0 0.0
    %861 = vmatprep.subr.mxu0 0.0
    %862 = vmatpush1.msra.mxu0 0.0
    %863 = vmatprep.subr.mxu0 0.0
    %864 = vmatpush1.msra.mxu0 0.0
    %865 = vmatprep.subr.mxu0 0.0
    %866 = vmatpush1.msra.mxu0 0.0
    %867 = vmatprep.subr.mxu0 0.0
    %868 = vmatpush1.msra.mxu0 0.0
    %869 = vmatprep.subr.mxu0 0.0
    %870 = vmatpush1.msra.mxu0 0.0
    %871 = vmatprep.subr.mxu0 0.0
    %872 = vmatpush1.msra.mxu0 0.0
    %873 = vmatprep.subr.mxu0 0.0
    %874 = vmatpush1.msra.mxu0 0.0
    %875 = vmatprep.subr.mxu0 0.0
    %876 = vmatpush1.msra.mxu0 0.0
    %877 = vmatprep.subr.mxu0 0.0
    %878 = vmatpush1.msra.mxu0 0.0
    %879 = vmatprep.subr.mxu0 0.0
    %880 = vmatpush1.msra.mxu0 0.0
    %881 = vmatprep.subr.mxu0 0.0
    %882 = vmatpush1.msra.mxu0 0.0
    %883 = vmatprep.subr.mxu0 0.0
    %884 = vmatpush1.msra.mxu0 0.0
    %885 = vmatprep.subr.mxu0 0.0
    %886 = vmatpush1.msra.mxu0 0.0
    %887 = vmatprep.subr.mxu0 0.0
    %888 = vmatpush1.msra.mxu0 0.0
    %889 = vmatprep.subr.mxu0 0.0
    %890 = vmatpush1.msra.mxu0 0.0
    %891 = vmatprep.subr.mxu0 0.0
    %892 = vmatpush1.msra.mxu0 0.0
    %893 = vmatprep.subr.mxu0 0.0
    %894 = vmatpush1.msra.mxu0 0.0
    %895 = vmatprep.subr.mxu0 0.0
    %896 = vmatpush1.msra.mxu0 0.0
    %897 = vmatprep.subr.mxu0 0.0
    %898 = vmatpush1.msra.mxu0 0.0
    %899 = vmatprep.mubr.f32.mxu0 0.0
    %900 = vmatmul.mubr.f32.gmra.mrb[0].mxu0 %v833
    %v901 = vpop.f32.mrb[0].mxu0
    %v902 = vadd.f32 0.0, %v901
    %v903 = vpop.f32.mrb[0].mxu0
    %904 = vdwg.mxu0
    %v905 = vadd.f32 %v427, %v902
    %v906 = vxor.u32 %v905, 2147483648
    %v907 = vmul.f32 %v906, 1.442695
    %v908 = vpow.pop %v907
    %v909 = vadd.f32 %v908, 1.0
    %v910 = vrcp.pop %v909
    %v911 = vmul.f32 1.0, %v910
    %v912 = vtanh.pop %v905
    %v913 = vmul.f32 %v911, %v823
    %915 = vrot.lane.b32.xlu0 %v912, 64
    %v916 = vpop.permute.xlu0 %915
    %v918 = vmul.f32 %v911, %v916
    %920 = vrot.lane.b32.xlu0 %v918, 32
    %v921 = vpop.permute.xlu0 %920
    %v923 = vadd.f32 %v913, %v921
    %v924 = vtanh.pop %v923
    %926 = vrot.lane.b32.xlu0 %v924, 64
    %v927 = vpop.permute.xlu0 %926
    %v929 = vmul.f32 %v911, %v927
    %931 = vrot.lane.b32.xlu0 %v929, 32
    %v932 = vpop.permute.xlu0 %931
    %v933 = vsel %vm431, %v932, 0
    %935 = vmatprep.subr.mxu0 0.0
    %936 = vmatpush1.msra.mxu0 %v35
    %937 = vmatprep.subr.mxu0 0.0
    %938 = vmatpush1.msra.mxu0 %v36
    %939 = vmatprep.subr.mxu0 0.0
    %940 = vmatpush1.msra.mxu0 %v37
    %941 = vmatprep.subr.mxu0 0.0
    %942 = vmatpush1.msra.mxu0 %v38
    %943 = vmatprep.subr.mxu0 0.0
    %944 = vmatpush1.msra.mxu0 0.0
    %945 = vmatprep.subr.mxu0 0.0
    %946 = vmatpush1.msra.mxu0 0.0
    %947 = vmatprep.subr.mxu0 0.0
    %948 = vmatpush1.msra.mxu0 0.0
    %949 = vmatprep.subr.mxu0 0.0
    %950 = vmatpush1.msra.mxu0 0.0
    %951 = vmatprep.subr.mxu0 0.0
    %952 = vmatpush1.msra.mxu0 0.0
    %953 = vmatprep.subr.mxu0 0.0
    %954 = vmatpush1.msra.mxu0 0.0
    %955 = vmatprep.subr.mxu0 0.0
    %956 = vmatpush1.msra.mxu0 0.0
    %957 = vmatprep.subr.mxu0 0.0
    %958 = vmatpush1.msra.mxu0 0.0
    %959 = vmatprep.subr.mxu0 0.0
    %960 = vmatpush1.msra.mxu0 0.0
    %961 = vmatprep.subr.mxu0 0.0
    %962 = vmatpush1.msra.mxu0 0.0
    %963 = vmatprep.subr.mxu0 0.0
    %964 = vmatpush1.msra.mxu0 0.0
    %965 = vmatprep.subr.mxu0 0.0
    %966 = vmatpush1.msra.mxu0 0.0
    %967 = vmatprep.subr.mxu0 0.0
    %968 = vmatpush1.msra.mxu0 0.0
    %969 = vmatprep.subr.mxu0 0.0
    %970 = vmatpush1.msra.mxu0 0.0
    %971 = vmatprep.subr.mxu0 0.0
    %972 = vmatpush1.msra.mxu0 0.0
    %973 = vmatprep.subr.mxu0 0.0
    %974 = vmatpush1.msra.mxu0 0.0
    %975 = vmatprep.subr.mxu0 0.0
    %976 = vmatpush1.msra.mxu0 0.0
    %977 = vmatprep.subr.mxu0 0.0
    %978 = vmatpush1.msra.mxu0 0.0
    %979 = vmatprep.subr.mxu0 0.0
    %980 = vmatpush1.msra.mxu0 0.0
    %981 = vmatprep.subr.mxu0 0.0
    %982 = vmatpush1.msra.mxu0 0.0
    %983 = vmatprep.subr.mxu0 0.0
    %984 = vmatpush1.msra.mxu0 0.0
    %985 = vmatprep.subr.mxu0 0.0
    %986 = vmatpush1.msra.mxu0 0.0
    %987 = vmatprep.subr.mxu0 0.0
    %988 = vmatpush1.msra.mxu0 0.0
    %989 = vmatprep.subr.mxu0 0.0
    %990 = vmatpush1.msra.mxu0 0.0
    %991 = vmatprep.subr.mxu0 0.0
    %992 = vmatpush1.msra.mxu0 0.0
    %993 = vmatprep.subr.mxu0 0.0
    %994 = vmatpush1.msra.mxu0 0.0
    %995 = vmatprep.subr.mxu0 0.0
    %996 = vmatpush1.msra.mxu0 0.0
    %997 = vmatprep.subr.mxu0 0.0
    %998 = vmatpush1.msra.mxu0 0.0
    %999 = vmatprep.mubr.f32.mxu0 0.0
    %1000 = vmatmul.mubr.f32.gmra.mrb[0].mxu0 %v933
    %v1001 = vpop.f32.mrb[0].mxu0
    %v1002 = vadd.f32 0.0, %v1001
    %v1003 = vpop.f32.mrb[0].mxu0
    %1004 = vdwg.mxu0
    %v1005 = vadd.f32 %v428, %v1002
    %v1006 = vxor.u32 %v1005, 2147483648
    %v1007 = vmul.f32 %v1006, 1.442695
    %v1008 = vpow.pop %v1007
    %v1009 = vadd.f32 %v1008, 1.0
    %v1010 = vrcp.pop %v1009
    %v1011 = vmul.f32 1.0, %v1010
    %v1012 = vtanh.pop %v1005
    %v1013 = vmul.f32 %v1011, %v923
    %1015 = vrot.lane.b32.xlu0 %v1012, 64
    %v1016 = vpop.permute.xlu0 %1015
    %v1018 = vmul.f32 %v1011, %v1016
    %1020 = vrot.lane.b32.xlu0 %v1018, 32
    %v1021 = vpop.permute.xlu0 %1020
    %v1023 = vadd.f32 %v1013, %v1021
    %v1024 = vtanh.pop %v1023
    %1026 = vrot.lane.b32.xlu0 %v1024, 64
    %v1027 = vpop.permute.xlu0 %1026
    %v1029 = vmul.f32 %v1011, %v1027
    %1031 = vrot.lane.b32.xlu0 %v1029, 32
    %v1032 = vpop.permute.xlu0 %1031
    %v1033 = vsel %vm431, %v1032, 0
    %1035 = vmatprep.subr.mxu0 0.0
    %1036 = vmatpush1.msra.mxu0 %v35
    %1037 = vmatprep.subr.mxu0 0.0
    %1038 = vmatpush1.msra.mxu0 %v36
    %1039 = vmatprep.subr.mxu0 0.0
    %1040 = vmatpush1.msra.mxu0 %v37
    %1041 = vmatprep.subr.mxu0 0.0
    %1042 = vmatpush1.msra.mxu0 %v38
    %1043 = vmatprep.subr.mxu0 0.0
    %1044 = vmatpush1.msra.mxu0 0.0
    %1045 = vmatprep.subr.mxu0 0.0
    %1046 = vmatpush1.msra.mxu0 0.0
    %1047 = vmatprep.subr.mxu0 0.0
    %1048 = vmatpush1.msra.mxu0 0.0
    %1049 = vmatprep.subr.mxu0 0.0
    %1050 = vmatpush1.msra.mxu0 0.0
    %1051 = vmatprep.subr.mxu0 0.0
    %1052 = vmatpush1.msra.mxu0 0.0
    %1053 = vmatprep.subr.mxu0 0.0
    %1054 = vmatpush1.msra.mxu0 0.0
    %1055 = vmatprep.subr.mxu0 0.0
    %1056 = vmatpush1.msra.mxu0 0.0
    %1057 = vmatprep.subr.mxu0 0.0
    %1058 = vmatpush1.msra.mxu0 0.0
    %1059 = vmatprep.subr.mxu0 0.0
    %1060 = vmatpush1.msra.mxu0 0.0
    %1061 = vmatprep.subr.mxu0 0.0
    %1062 = vmatpush1.msra.mxu0 0.0
    %1063 = vmatprep.subr.mxu0 0.0
    %1064 = vmatpush1.msra.mxu0 0.0
    %1065 = vmatprep.subr.mxu0 0.0
    %1066 = vmatpush1.msra.mxu0 0.0
    %1067 = vmatprep.subr.mxu0 0.0
    %1068 = vmatpush1.msra.mxu0 0.0
    %1069 = vmatprep.subr.mxu0 0.0
    %1070 = vmatpush1.msra.mxu0 0.0
    %1071 = vmatprep.subr.mxu0 0.0
    %1072 = vmatpush1.msra.mxu0 0.0
    %1073 = vmatprep.subr.mxu0 0.0
    %1074 = vmatpush1.msra.mxu0 0.0
    %1075 = vmatprep.subr.mxu0 0.0
    %1076 = vmatpush1.msra.mxu0 0.0
    %1077 = vmatprep.subr.mxu0 0.0
    %1078 = vmatpush1.msra.mxu0 0.0
    %1079 = vmatprep.subr.mxu0 0.0
    %1080 = vmatpush1.msra.mxu0 0.0
    %1081 = vmatprep.subr.mxu0 0.0
    %1082 = vmatpush1.msra.mxu0 0.0
    %1083 = vmatprep.subr.mxu0 0.0
    %1084 = vmatpush1.msra.mxu0 0.0
    %1085 = vmatprep.subr.mxu0 0.0
    %1086 = vmatpush1.msra.mxu0 0.0
    %1087 = vmatprep.subr.mxu0 0.0
    %1088 = vmatpush1.msra.mxu0 0.0
    %1089 = vmatprep.subr.mxu0 0.0
    %1090 = vmatpush1.msra.mxu0 0.0
    %1091 = vmatprep.subr.mxu0 0.0
    %1092 = vmatpush1.msra.mxu0 0.0
    %1093 = vmatprep.subr.mxu0 0.0
    %1094 = vmatpush1.msra.mxu0 0.0
    %1095 = vmatprep.subr.mxu0 0.0
    %1096 = vmatpush1.msra.mxu0 0.0
    %1097 = vmatprep.subr.mxu0 0.0
    %1098 = vmatpush1.msra.mxu0 0.0
    %1099 = vmatprep.mubr.f32.mxu0 0.0
    %1100 = vmatmul.mubr.f32.gmra.mrb[0].mxu0 %v1033
    %v1101 = vpop.f32.mrb[0].mxu0
    %v1102 = vadd.f32 0.0, %v1101
    %v1103 = vpop.f32.mrb[0].mxu0
    %1104 = vdwg.mxu0
    %v1105 = vadd.f32 %v429, %v1102
    %v1106 = vxor.u32 %v1105, 2147483648
    %v1107 = vmul.f32 %v1106, 1.442695
    %v1108 = vpow.pop %v1107
    %v1109 = vadd.f32 %v1108, 1.0
    %v1110 = vrcp.pop %v1109
    %v1111 = vmul.f32 1.0, %v1110
    %v1112 = vtanh.pop %v1105
    %v1113 = vmul.f32 %v1111, %v1023
    %1115 = vrot.lane.b32.xlu0 %v1112, 64
    %v1116 = vpop.permute.xlu0 %1115
    %v1118 = vmul.f32 %v1111, %v1116
    %1120 = vrot.lane.b32.xlu0 %v1118, 32
    %v1121 = vpop.permute.xlu0 %1120
    %v1123 = vadd.f32 %v1113, %v1121
    %v1124 = vtanh.pop %v1123
    %1126 = vrot.lane.b32.xlu0 %v1124, 64
    %v1127 = vpop.permute.xlu0 %1126
    %v1129 = vmul.f32 %v1111, %v1127
    %1131 = vrot.lane.b32.xlu0 %v1129, 32
    %v1132 = vpop.permute.xlu0 %1131
    %v1133 = vsel %vm431, %v1132, 0
    %1135 = vmatprep.subr.mxu0 0.0
    %1136 = vmatpush1.msra.mxu0 %v35
    %1137 = vmatprep.subr.mxu0 0.0
    %1138 = vmatpush1.msra.mxu0 %v36
    %1139 = vmatprep.subr.mxu0 0.0
    %1140 = vmatpush1.msra.mxu0 %v37
    %1141 = vmatprep.subr.mxu0 0.0
    %1142 = vmatpush1.msra.mxu0 %v38
    %1143 = vmatprep.subr.mxu0 0.0
    %1144 = vmatpush1.msra.mxu0 0.0
    %1145 = vmatprep.subr.mxu0 0.0
    %1146 = vmatpush1.msra.mxu0 0.0
    %1147 = vmatprep.subr.mxu0 0.0
    %1148 = vmatpush1.msra.mxu0 0.0
    %1149 = vmatprep.subr.mxu0 0.0
    %1150 = vmatpush1.msra.mxu0 0.0
    %1151 = vmatprep.subr.mxu0 0.0
    %1152 = vmatpush1.msra.mxu0 0.0
    %1153 = vmatprep.subr.mxu0 0.0
    %1154 = vmatpush1.msra.mxu0 0.0
    %1155 = vmatprep.subr.mxu0 0.0
    %1156 = vmatpush1.msra.mxu0 0.0
    %1157 = vmatprep.subr.mxu0 0.0
    %1158 = vmatpush1.msra.mxu0 0.0
    %1159 = vmatprep.subr.mxu0 0.0
    %1160 = vmatpush1.msra.mxu0 0.0
    %1161 = vmatprep.subr.mxu0 0.0
    %1162 = vmatpush1.msra.mxu0 0.0
    %1163 = vmatprep.subr.mxu0 0.0
    %1164 = vmatpush1.msra.mxu0 0.0
    %1165 = vmatprep.subr.mxu0 0.0
    %1166 = vmatpush1.msra.mxu0 0.0
    %1167 = vmatprep.subr.mxu0 0.0
    %1168 = vmatpush1.msra.mxu0 0.0
    %1169 = vmatprep.subr.mxu0 0.0
    %1170 = vmatpush1.msra.mxu0 0.0
    %1171 = vmatprep.subr.mxu0 0.0
    %1172 = vmatpush1.msra.mxu0 0.0
    %1173 = vmatprep.subr.mxu0 0.0
    %1174 = vmatpush1.msra.mxu0 0.0
    %1175 = vmatprep.subr.mxu0 0.0
    %1176 = vmatpush1.msra.mxu0 0.0
    %1177 = vmatprep.subr.mxu0 0.0
    %1178 = vmatpush1.msra.mxu0 0.0
    %1179 = vmatprep.subr.mxu0 0.0
    %1180 = vmatpush1.msra.mxu0 0.0
    %1181 = vmatprep.subr.mxu0 0.0
    %1182 = vmatpush1.msra.mxu0 0.0
    %1183 = vmatprep.subr.mxu0 0.0
    %1184 = vmatpush1.msra.mxu0 0.0
    %1185 = vmatprep.subr.mxu0 0.0
    %1186 = vmatpush1.msra.mxu0 0.0
    %1187 = vmatprep.subr.mxu0 0.0
    %1188 = vmatpush1.msra.mxu0 0.0
    %1189 = vmatprep.subr.mxu0 0.0
    %1190 = vmatpush1.msra.mxu0 0.0
    %1191 = vmatprep.subr.mxu0 0.0
    %1192 = vmatpush1.msra.mxu0 0.0
    %1193 = vmatprep.subr.mxu0 0.0
    %1194 = vmatpush1.msra.mxu0 0.0
    %1195 = vmatprep.subr.mxu0 0.0
    %1196 = vmatpush1.msra.mxu0 0.0
    %1197 = vmatprep.subr.mxu0 0.0
    %1198 = vmatpush1.msra.mxu0 0.0
    %1199 = vmatprep.mubr.f32.mxu0 0.0
    %1200 = vmatmul.mubr.f32.gmra.mrb[0].mxu0 %v1133
    %v1201 = vpop.f32.mrb[0].mxu0
    %v1202 = vadd.f32 0.0, %v1201
    %v1203 = vpop.f32.mrb[0].mxu0
    %1204 = vdwg.mxu0
    %v1205 = vadd.f32 %v430, %v1202
    %v1206 = vxor.u32 %v1205, 2147483648
    %v1207 = vmul.f32 %v1206, 1.442695
    %v1208 = vpow.pop %v1207
    %v1209 = vadd.f32 %v1208, 1.0
    %v1210 = vrcp.pop %v1209
    %v1211 = vmul.f32 1.0, %v1210
    %v1212 = vtanh.pop %v1205
    %v1213 = vmul.f32 %v1211, %v1123
    %1215 = vrot.lane.b32.xlu0 %v1212, 64
    %v1216 = vpop.permute.xlu0 %1215
    %v1218 = vmul.f32 %v1211, %v1216
    %1220 = vrot.lane.b32.xlu0 %v1218, 32
    %v1221 = vpop.permute.xlu0 %1220
    %v1223 = vadd.f32 %v1213, %v1221
    %v1224 = vtanh.pop %v1223
    %1226 = vrot.lane.b32.xlu0 %v1224, 64
    %v1227 = vpop.permute.xlu0 %1226
    %v1229 = vmul.f32 %v1211, %v1227
    %v1230 = vlaneseq
    %v1231 = vshrl.u32 %v1230, 7
    %v1232 = vsub.s32 0, %v1231
    %v1233 = vrot.slane %v43, %v1232
    %1235 = vrot.lane.b32.xlu0 %v1229, 32
    %v1236 = vpop.permute.xlu0 %1235
    %v1237 = vsel %vm431, %v1236, 0
    %1239 = vmatprep.subr.mxu0 0.0
    %1240 = vmatpush1.msra.mxu0 %v39
    %1241 = vmatprep.subr.mxu0 0.0
    %1242 = vmatpush1.msra.mxu0 %v40
    %1243 = vmatprep.subr.mxu0 0.0
    %1244 = vmatpush1.msra.mxu0 %v41
    %1245 = vmatprep.subr.mxu0 0.0
    %1246 = vmatpush1.msra.mxu0 %v42
    %1247 = vmatprep.subr.mxu0 0.0
    %1248 = vmatpush1.msra.mxu0 0.0
    %1249 = vmatprep.subr.mxu0 0.0
    %1250 = vmatpush1.msra.mxu0 0.0
    %1251 = vmatprep.subr.mxu0 0.0
    %1252 = vmatpush1.msra.mxu0 0.0
    %1253 = vmatprep.subr.mxu0 0.0
    %1254 = vmatpush1.msra.mxu0 0.0
    %1255 = vmatprep.subr.mxu0 0.0
    %1256 = vmatpush1.msra.mxu0 0.0
    %1257 = vmatprep.subr.mxu0 0.0
    %1258 = vmatpush1.msra.mxu0 0.0
    %1259 = vmatprep.subr.mxu0 0.0
    %1260 = vmatpush1.msra.mxu0 0.0
    %1261 = vmatprep.subr.mxu0 0.0
    %1262 = vmatpush1.msra.mxu0 0.0
    %1263 = vmatprep.subr.mxu0 0.0
    %1264 = vmatpush1.msra.mxu0 0.0
    %1265 = vmatprep.subr.mxu0 0.0
    %1266 = vmatpush1.msra.mxu0 0.0
    %1267 = vmatprep.subr.mxu0 0.0
    %1268 = vmatpush1.msra.mxu0 0.0
    %1269 = vmatprep.subr.mxu0 0.0
    %1270 = vmatpush1.msra.mxu0 0.0
    %1271 = vmatprep.subr.mxu0 0.0
    %1272 = vmatpush1.msra.mxu0 0.0
    %1273 = vmatprep.subr.mxu0 0.0
    %1274 = vmatpush1.msra.mxu0 0.0
    %1275 = vmatprep.subr.mxu0 0.0
    %1276 = vmatpush1.msra.mxu0 0.0
    %1277 = vmatprep.subr.mxu0 0.0
    %1278 = vmatpush1.msra.mxu0 0.0
    %1279 = vmatprep.subr.mxu0 0.0
    %1280 = vmatpush1.msra.mxu0 0.0
    %1281 = vmatprep.subr.mxu0 0.0
    %1282 = vmatpush1.msra.mxu0 0.0
    %1283 = vmatprep.subr.mxu0 0.0
    %1284 = vmatpush1.msra.mxu0 0.0
    %1285 = vmatprep.subr.mxu0 0.0
    %1286 = vmatpush1.msra.mxu0 0.0
    %1287 = vmatprep.subr.mxu0 0.0
    %1288 = vmatpush1.msra.mxu0 0.0
    %1289 = vmatprep.subr.mxu0 0.0
    %1290 = vmatpush1.msra.mxu0 0.0
    %1291 = vmatprep.subr.mxu0 0.0
    %1292 = vmatpush1.msra.mxu0 0.0
    %1293 = vmatprep.subr.mxu0 0.0
    %1294 = vmatpush1.msra.mxu0 0.0
    %1295 = vmatprep.subr.mxu0 0.0
    %1296 = vmatpush1.msra.mxu0 0.0
    %1297 = vmatprep.subr.mxu0 0.0
    %1298 = vmatpush1.msra.mxu0 0.0
    %1299 = vmatprep.subr.mxu0 0.0
    %1300 = vmatpush1.msra.mxu0 0.0
    %1301 = vmatprep.subr.mxu0 0.0
    %1302 = vmatpush1.msra.mxu0 0.0
    %1303 = vmatprep.mubr.f32.mxu0 0.0
    %1304 = vmatmul.mubr.f32.gmra.mrb[0].mxu0 %v1237
    %v1305 = vpop.f32.mrb[0].mxu0
    %v1306 = vadd.f32 %v1233, %v1305
    %v1307 = vpop.f32.mrb[0].mxu0
    %1308 = vdwg.mxu0
    %v1309 = vlaneseq
    %v1310 = vshrl.u32 %v1309, 7
    %v1311 = vsub.s32 0, %v1310
    %v1312 = vrot.slane %v60, %v1311
    %1313 = vmatprep.subr.mxu0 0.0
    %1314 = vmatpush1.msra.mxu0 %v44
    %1315 = vmatprep.subr.mxu0 0.0
    %1316 = vmatpush1.msra.mxu0 %v45
    %1317 = vmatprep.subr.mxu0 0.0
    %1318 = vmatpush1.msra.mxu0 %v46
    %1319 = vmatprep.subr.mxu0 0.0
    %1320 = vmatpush1.msra.mxu0 %v47
    %1321 = vmatprep.subr.mxu0 0.0
    %1322 = vmatpush1.msra.mxu0 %v48
    %1323 = vmatprep.subr.mxu0 0.0
    %1324 = vmatpush1.msra.mxu0 %v49
    %1325 = vmatprep.subr.mxu0 0.0
    %1326 = vmatpush1.msra.mxu0 %v50
    %1327 = vmatprep.subr.mxu0 0.0
    %1328 = vmatpush1.msra.mxu0 %v51
    %1329 = vmatprep.subr.mxu0 0.0
    %1330 = vmatpush1.msra.mxu0 %v52
    %1331 = vmatprep.subr.mxu0 0.0
    %1332 = vmatpush1.msra.mxu0 %v53
    %1333 = vmatprep.subr.mxu0 0.0
    %1334 = vmatpush1.msra.mxu0 %v54
    %1335 = vmatprep.subr.mxu0 0.0
    %1336 = vmatpush1.msra.mxu0 %v55
    %1337 = vmatprep.subr.mxu0 0.0
    %1338 = vmatpush1.msra.mxu0 %v56
    %1339 = vmatprep.subr.mxu0 0.0
    %1340 = vmatpush1.msra.mxu0 %v57
    %1341 = vmatprep.subr.mxu0 0.0
    %1342 = vmatpush1.msra.mxu0 %v58
    %1343 = vmatprep.subr.mxu0 0.0
    %1344 = vmatpush1.msra.mxu0 %v59
    %1345 = vmatprep.subr.mxu0 0.0
    %1346 = vmatpush1.msra.mxu0 0.0
    %1347 = vmatprep.subr.mxu0 0.0
    %1348 = vmatpush1.msra.mxu0 0.0
    %1349 = vmatprep.subr.mxu0 0.0
    %1350 = vmatpush1.msra.mxu0 0.0
    %1351 = vmatprep.subr.mxu0 0.0
    %1352 = vmatpush1.msra.mxu0 0.0
    %1353 = vmatprep.subr.mxu0 0.0
    %1354 = vmatpush1.msra.mxu0 0.0
    %1355 = vmatprep.subr.mxu0 0.0
    %1356 = vmatpush1.msra.mxu0 0.0
    %1357 = vmatprep.subr.mxu0 0.0
    %1358 = vmatpush1.msra.mxu0 0.0
    %1359 = vmatprep.subr.mxu0 0.0
    %1360 = vmatpush1.msra.mxu0 0.0
    %1361 = vmatprep.subr.mxu0 0.0
    %1362 = vmatpush1.msra.mxu0 0.0
    %1363 = vmatprep.subr.mxu0 0.0
    %1364 = vmatpush1.msra.mxu0 0.0
    %1365 = vmatprep.subr.mxu0 0.0
    %1366 = vmatpush1.msra.mxu0 0.0
    %1367 = vmatprep.subr.mxu0 0.0
    %1368 = vmatpush1.msra.mxu0 0.0
    %1369 = vmatprep.subr.mxu0 0.0
    %1370 = vmatpush1.msra.mxu0 0.0
    %1371 = vmatprep.subr.mxu0 0.0
    %1372 = vmatpush1.msra.mxu0 0.0
    %1373 = vmatprep.subr.mxu0 0.0
    %1374 = vmatpush1.msra.mxu0 0.0
    %1375 = vmatprep.subr.mxu0 0.0
    %1376 = vmatpush1.msra.mxu0 0.0
    %1377 = vmatprep.mubr.f32.mxu0 0.0
    %1378 = vmatmul.mubr.f32.gmra.mrb[0].mxu0 %v1306
    %v1379 = vpop.f32.mrb[0].mxu0
    %v1380 = vadd.f32 %v1312, %v1379
    %v1381 = vpop.f32.mrb[0].mxu0
    %1382 = vdwg.mxu0
    %1383 = vst [vmem:[%s2] sm:$0xff] %v1380
    // Predicated region
    $region14: #{lstm_2in_1out_forward.1} parent=1 // pred_check
      _
    $region15: #{lstm_2in_1out_forward.1} parent=1 // pred_check_branch
      %1385 = sbr.rel (0) target = $region17
    $region16: #{lstm_2in_1out_forward.1} parent=1 // pred_region
      _
    $region17: #{lstm_2in_1out_forward.1} parent=1 // pred_fallthru
      _
    // Predicated region
    $region18: #{lstm_2in_1out_forward.1} parent=1 // pred_check
      _
    $region19: #{lstm_2in_1out_forward.1} parent=1 // pred_check_branch
      %1387 = sbr.rel (0) target = $region21
    $region20: #{lstm_2in_1out_forward.1} parent=1 // pred_region
      _
    $region21: #{lstm_2in_1out_forward.1} parent=1 // pred_fallthru
      _
    %1388 = vsyncpa [#allocation3], 1

</llo_original>
